<compile_context>
chip_gen: v6e
topology: v6e:2x2x1
jax: 0.10.0
libtpu: 0.0.40
codegen_flags: <defaults>
</compile_context>

<pallas_src>
import numpy as np
import jax
import jax.numpy as jnp
from jax.experimental import pallas as pl
from jax.experimental.pallas import tpu as pltpu

# ------------------------- model hyper-parameters (small, synthetic) -----------------
NUM_LAYERS = 3      # dilations 1, 2, 4
NUM_F_MAPS = 32     # F
DIM = 16            # input channels
NUM_CLASSES = 8
BATCH = 2
T_LEN = 64
LANE = 128          # TPU lane width


# ---------------------------------- Pallas kernel ------------------------------------
def refinement_kernel(x_ref, w_in_ref, b_in_ref,
                      w_dil_ref, b_dil_ref, w_1x1_ref, b_1x1_ref,
                      w_out_ref, b_out_ref, o_ref, pad_ref):
    # Shapes (all static):
    #   x_ref     : (N*T, D)
    #   w_in_ref  : (D, F)        b_in_ref : (1, F)
    #   w_dil_ref : (L, 3F, F)    b_dil_ref: (L, F)     (taps k=0,1,2 stacked along rows)
    #   w_1x1_ref : (L, F, F)     b_1x1_ref: (L, F)
    #   w_out_ref : (F, 128)      b_out_ref: (1, 128)   (zero-padded past num_classes)
    #   o_ref     : (N*T, 128)
    #   pad_ref   : (N, T + 2*halo, F) VMEM scratch, halo is sublane-aligned (>= max dilation)
    N, t_pad, F = pad_ref.shape
    NT = x_ref.shape[0]
    T = NT // N
    halo = (t_pad - T) // 2
    L = w_dil_ref.shape[0]

    # conv_in: pointwise conv == channel matmul
    out = jnp.dot(x_ref[...], w_in_ref[...],
                  preferred_element_type=jnp.float32) + b_in_ref[0]

    # Zero the padded scratch once.  Only the center [halo, halo+T) rows are ever
    # rewritten, so the halo rows stay zero for every layer: they provide the
    # dilated conv's zero padding and isolate batch elements from each other.
    pad_ref[...] = jnp.zeros_like(pad_ref)

    for i in range(L):                                   # static unroll over layers
        d = 2 ** i
        # Write current activations into the (sublane-aligned) center of the scratch.
        pad_ref[:, halo:halo + T, :] = out.reshape(N, T, F)
        # Dilated taps as static slices of the padded scratch (t-d, t, t+d).
        left = pad_ref[:, halo - d:halo - d + T, :].reshape(NT, F)   # x[t-d]
        right = pad_ref[:, halo + d:halo + d + T, :].reshape(NT, F)  # x[t+d]
        # Fused 3-tap dilated conv: one (NT, 3F) @ (3F, F) matmul.
        slab = jnp.concatenate([left, out, right], axis=-1)          # (NT, 3F)
        h = jnp.dot(slab, w_dil_ref[i],
                    preferred_element_type=jnp.float32) + b_dil_ref[i]
        h = jnp.maximum(h, 0.0)                                      # ReLU
        h = jnp.dot(h, w_1x1_ref[i],
                    preferred_element_type=jnp.float32) + b_1x1_ref[i]
        # TODO(synk): nn.Dropout is identity at inference; training-mode random masking
        # (with pltpu.prng_random_bits) is not implemented here.
        out = out + h                                                # residual

    # conv_out with lane-padded weights -> unmasked lane-dense (NT, 128) store.
    y = jnp.dot(out, w_out_ref[...], preferred_element_type=jnp.float32) + b_out_ref[0]
    o_ref[...] = y.astype(o_ref.dtype)


# ------------------------------------ wrapper ----------------------------------------
def refinement_forward(x_nct, mask, params):
    """x_nct: (N, dim, T) PyTorch layout.  mask is unused (matches PyTorch forward)."""
    del mask
    x = jnp.transpose(x_nct, (0, 2, 1)).astype(jnp.float32)   # (N, T, D)
    N, T, D = x.shape
    F = params["w_in"].shape[1]
    C_out = params["w_out"].shape[1]
    L = params["w_dil"].shape[0]
    NT = N * T

    # Sublane-aligned halo, large enough for the max dilation.
    max_dil = 2 ** (L - 1)
    halo = ((max_dil + 7) // 8) * 8
    t_pad = T + 2 * halo

    # Host-side parameter packing (done once, free):
    x_flat = x.reshape(NT, D)
    w_dil = params["w_dil"].reshape(L, 3 * F, F)               # taps stacked along rows
    c_pad = ((C_out + LANE - 1) // LANE) * LANE                # lane-dense output width
    w_out_p = jnp.zeros((F, c_pad), jnp.float32).at[:, :C_out].set(params["w_out"])
    b_out_p = jnp.zeros((1, c_pad), jnp.float32).at[0, :C_out].set(params["b_out"])

    out_flat = pl.pallas_call(
        refinement_kernel,
        out_shape=jax.ShapeDtypeStruct((NT, c_pad), jnp.float32),
        grid=(1,),                                             # single invocation (batch folded)
        in_specs=[
            pl.BlockSpec((NT, D), lambda g: (0, 0)),           # x (all batch rows)
            pl.BlockSpec((D, F), lambda g: (0, 0)),            # w_in^T
            pl.BlockSpec((1, F), lambda g: (0, 0)),            # b_in
            pl.BlockSpec((L, 3 * F, F), lambda g: (0, 0, 0)),  # dilated conv weights (fused taps)
            pl.BlockSpec((L, F), lambda g: (0, 0)),            # dilated conv biases
            pl.BlockSpec((L, F, F), lambda g: (0, 0, 0)),      # 1x1 weights
            pl.BlockSpec((L, F), lambda g: (0, 0)),            # 1x1 biases
            pl.BlockSpec((F, c_pad), lambda g: (0, 0)),        # w_out^T (lane-padded)
            pl.BlockSpec((1, c_pad), lambda g: (0, 0)),        # b_out (lane-padded)
        ],
        out_specs=pl.BlockSpec((NT, c_pad), lambda g: (0, 0)),
        scratch_shapes=[pltpu.VMEM((N, t_pad, F), jnp.float32)],   # zero-padded activations
        compiler_params=pltpu.CompilerParams(dimension_semantics=("arbitrary",)),
    )(x_flat, params["w_in"], params["b_in"][None], w_dil, params["b_dil"],
      params["w_1x1"], params["b_1x1"], w_out_p, b_out_p)

    y = out_flat[:, :C_out].reshape(N, T, C_out)               # drop lane padding
    return jnp.transpose(y, (0, 2, 1))                         # back to (N, C_out, T)


# ------------------------------ pure-JAX reference -----------------------------------
def _ref_shift(x, s):
    T = x.shape[1]
    if s == 0:
        return x
    if s > 0:
        return jnp.concatenate([x[:, s:], jnp.zeros_like(x[:, :s])], axis=1)
    return jnp.concatenate([jnp.zeros_like(x[:, :(-s)]), x[:, :T + s]], axis=1)


def refinement_ref(x_nct, params):
    x = jnp.transpose(x_nct, (0, 2, 1)).astype(jnp.float32)   # (N, T, D)
    out = x @ params["w_in"] + params["b_in"]
    L = params["w_dil"].shape[0]
    for i in range(L):
        d = 2 ** i
        acc = jnp.zeros_like(out)
        for k in range(3):
            acc += _ref_shift(out, (k - 1) * d) @ params["w_dil"][i, k]
        h = jnp.maximum(acc + params["b_dil"][i], 0.0)
        h = h @ params["w_1x1"][i] + params["b_1x1"][i]
        out = out + h
    y = out @ params["w_out"] + params["b_out"]
    return jnp.transpose(y, (0, 2, 1))


# --------------------------------- parameter init ------------------------------------
def init_params(key):
    ks = jax.random.split(key, 8)
    scale = 0.1
    # 1x1 convs stored pre-transposed as (Cin, Cout); dilated conv as (L, 3, Cin, Cout)
    return {
        "w_in":  scale * jax.random.normal(ks[0], (DIM, NUM_F_MAPS), jnp.float32),
        "b_in":  scale * jax.random.normal(ks[1], (NUM_F_MAPS,), jnp.float32),
        "w_dil": scale * jax.random.normal(ks[2], (NUM_LAYERS, 3, NUM_F_MAPS, NUM_F_MAPS), jnp.float32),
        "b_dil": scale * jax.random.normal(ks[3], (NUM_LAYERS, NUM_F_MAPS), jnp.float32),
        "w_1x1": scale * jax.random.normal(ks[4], (NUM_LAYERS, NUM_F_MAPS, NUM_F_MAPS), jnp.float32),
        "b_1x1": scale * jax.random.normal(ks[5], (NUM_LAYERS, NUM_F_MAPS), jnp.float32),
        "w_out": scale * jax.random.normal(ks[6], (NUM_F_MAPS, NUM_CLASSES), jnp.float32),
        "b_out": scale * jax.random.normal(ks[7], (NUM_CLASSES,), jnp.float32),
    }


# -------------------------------------- main -----------------------------------------
if __name__ == "__main__":
    key = jax.random.PRNGKey(0)
    k_x, k_p = jax.random.split(key)

    params = init_params(k_p)
    x = jax.random.normal(k_x, (BATCH, DIM, T_LEN), jnp.float32)      # PyTorch (N, C, T)
    mask = jnp.ones((BATCH, NUM_CLASSES, T_LEN), jnp.float32)          # unused by forward

    out = refinement_forward(x, mask, params)
    out = jax.block_until_ready(out)

    ref = jax.block_until_ready(refinement_ref(x, params))
    assert out.shape == (BATCH, NUM_CLASSES, T_LEN), out.shape
    np.testing.assert_allclose(np.asarray(out), np.asarray(ref), rtol=1e-4, atol=1e-4)

    print("KERNEL_OK")
</pallas_src>

<mosaic_0001>
module attributes {stable_mosaic.version = 11 : i64} {
  func.func @refinement_kernel(%arg0: i32, %arg1: memref<128x16xf32, #tpu.memory_space<vmem>>, %arg2: memref<16x32xf32, #tpu.memory_space<vmem>>, %arg3: memref<1x32xf32, #tpu.memory_space<vmem>>, %arg4: memref<3x96x32xf32, #tpu.memory_space<vmem>>, %arg5: memref<3x32xf32, #tpu.memory_space<vmem>>, %arg6: memref<3x32x32xf32, #tpu.memory_space<vmem>>, %arg7: memref<3x32xf32, #tpu.memory_space<vmem>>, %arg8: memref<32x128xf32, #tpu.memory_space<vmem>>, %arg9: memref<1x128xf32, #tpu.memory_space<vmem>>, %arg10: memref<128x128xf32, #tpu.memory_space<vmem>>, %arg11: memref<2x80x32xf32, #tpu.memory_space<vmem>>) attributes {dimension_semantics = [#tpu.dimension_semantics<arbitrary>], iteration_bounds = array<i64: 1>, scalar_prefetch = 0 : i64, scratch_operands = 1 : i64, tpu.core_type = #tpu.core_type<tc>, window_params = [{pipeline_mode = #tpu.pipeline_mode<synchronous>, transform_indices = @transform_0, window_bounds = array<i64: 128, 16>}, {pipeline_mode = #tpu.pipeline_mode<synchronous>, transform_indices = @transform_1, window_bounds = array<i64: 16, 32>}, {pipeline_mode = #tpu.pipeline_mode<synchronous>, transform_indices = @transform_2, window_bounds = array<i64: 1, 32>}, {pipeline_mode = #tpu.pipeline_mode<synchronous>, transform_indices = @transform_3, window_bounds = array<i64: 3, 96, 32>}, {pipeline_mode = #tpu.pipeline_mode<synchronous>, transform_indices = @transform_4, window_bounds = array<i64: 3, 32>}, {pipeline_mode = #tpu.pipeline_mode<synchronous>, transform_indices = @transform_5, window_bounds = array<i64: 3, 32, 32>}, {pipeline_mode = #tpu.pipeline_mode<synchronous>, transform_indices = @transform_6, window_bounds = array<i64: 3, 32>}, {pipeline_mode = #tpu.pipeline_mode<synchronous>, transform_indices = @transform_7, window_bounds = array<i64: 32, 128>}, {pipeline_mode = #tpu.pipeline_mode<synchronous>, transform_indices = @transform_8, window_bounds = array<i64: 1, 128>}, {pipeline_mode = #tpu.pipeline_mode<synchronous>, transform_indices = @transform_9, window_bounds = array<i64: 128, 128>}]} {
    %c0 = arith.constant 0 : index
    %c0_0 = arith.constant 0 : index
    %0 = vector.load %arg1[%c0, %c0_0] : memref<128x16xf32, #tpu.memory_space<vmem>>, vector<128x16xf32>
    %c0_1 = arith.constant 0 : index
    %c0_2 = arith.constant 0 : index
    %1 = vector.load %arg2[%c0_1, %c0_2] : memref<16x32xf32, #tpu.memory_space<vmem>>, vector<16x32xf32>
    %cst = arith.constant dense<0.000000e+00> : vector<128x32xf32>
    %2 = tpu.matmul %0, %1, %cst {dimension_numbers = #tpu.dot_dimension_numbers<[1], [0], [0], [1], [0, 0, 1, 1], [], []>} : vector<128x16xf32>, vector<16x32xf32>, vector<128x32xf32> -> vector<128x32xf32>
    %c0_3 = arith.constant 0 : index
    %c0_4 = arith.constant 0 : index
    %3 = vector.load %arg3[%c0_3, %c0_4] : memref<1x32xf32, #tpu.memory_space<vmem>>, vector<1x32xf32>
    %4 = vector.shape_cast %3 : vector<1x32xf32> to vector<32xf32>
    %5 = vector.shape_cast %4 : vector<32xf32> to vector<1x32xf32>
    %6 = vector.broadcast %5 : vector<1x32xf32> to vector<128x32xf32>
    %7 = arith.addf %2, %6 : vector<128x32xf32>
    %cst_5 = arith.constant 0.000000e+00 : f32
    %8 = vector.broadcast %cst_5 : f32 to vector<2x80x32xf32>
    %c0_6 = arith.constant 0 : index
    %c0_7 = arith.constant 0 : index
    %c0_8 = arith.constant 0 : index
    %9 = vector.load %arg11[%c0_6, %c0_7, %c0_8] : memref<2x80x32xf32, #tpu.memory_space<vmem>>, vector<2x80x32xf32>
    tpu.vector_store %arg11[%c0_6, %c0_7, %c0_8], %8 {strides = array<i32>} : memref<2x80x32xf32, #tpu.memory_space<vmem>>, vector<2x80x32xf32>,
    %10 = vector.shape_cast %7 : vector<128x32xf32> to vector<2x64x32xf32>
    %c0_9 = arith.constant 0 : index
    %c8 = arith.constant 8 : index
    %c0_10 = arith.constant 0 : index
    %11 = vector.load %arg11[%c0_9, %c8, %c0_10] : memref<2x80x32xf32, #tpu.memory_space<vmem>>, vector<2x64x32xf32>
    tpu.vector_store %arg11[%c0_9, %c8, %c0_10], %10 {strides = array<i32>} : memref<2x80x32xf32, #tpu.memory_space<vmem>>, vector<2x64x32xf32>,
    %c0_11 = arith.constant 0 : index
    %c7 = arith.constant 7 : index
    %c0_12 = arith.constant 0 : index
    %12 = vector.load %arg11[%c0_11, %c7, %c0_12] : memref<2x80x32xf32, #tpu.memory_space<vmem>>, vector<2x64x32xf32>
    %13 = vector.shape_cast %12 : vector<2x64x32xf32> to vector<128x32xf32>
    %c0_13 = arith.constant 0 : index
    %c9 = arith.constant 9 : index
    %c0_14 = arith.constant 0 : index
    %14 = vector.load %arg11[%c0_13, %c9, %c0_14] : memref<2x80x32xf32, #tpu.memory_space<vmem>>, vector<2x64x32xf32>
    %15 = vector.shape_cast %14 : vector<2x64x32xf32> to vector<128x32xf32>
    %16 = tpu.concatenate %13, %7, %15 in 1 : vector<128x32xf32>, vector<128x32xf32>, vector<128x32xf32> -> vector<128x96xf32>
    %c0_15 = arith.constant 0 : index
    %c0_16 = arith.constant 0 : index
    %c0_17 = arith.constant 0 : index
    %17 = vector.load %arg4[%c0_15, %c0_16, %c0_17] : memref<3x96x32xf32, #tpu.memory_space<vmem>>, vector<1x96x32xf32>
    %18 = vector.shape_cast %17 : vector<1x96x32xf32> to vector<96x32xf32>
    %cst_18 = arith.constant dense<0.000000e+00> : vector<128x32xf32>
    %19 = tpu.matmul %16, %18, %cst_18 {dimension_numbers = #tpu.dot_dimension_numbers<[1], [0], [0], [1], [0, 0, 1, 1], [], []>} : vector<128x96xf32>, vector<96x32xf32>, vector<128x32xf32> -> vector<128x32xf32>
    %c0_19 = arith.constant 0 : index
    %c0_20 = arith.constant 0 : index
    %20 = vector.load %arg5[%c0_19, %c0_20] : memref<3x32xf32, #tpu.memory_space<vmem>>, vector<1x32xf32>
    %21 = vector.shape_cast %20 : vector<1x32xf32> to vector<32xf32>
    %22 = vector.shape_cast %21 : vector<32xf32> to vector<1x32xf32>
    %23 = vector.broadcast %22 : vector<1x32xf32> to vector<128x32xf32>
    %24 = arith.addf %19, %23 : vector<128x32xf32>
    %cst_21 = arith.constant 0.000000e+00 : f32
    %25 = vector.broadcast %cst_21 : f32 to vector<128x32xf32>
    %26 = arith.maximumf %24, %25 : vector<128x32xf32>
    %c0_22 = arith.constant 0 : index
    %c0_23 = arith.constant 0 : index
    %c0_24 = arith.constant 0 : index
    %27 = vector.load %arg6[%c0_22, %c0_23, %c0_24] : memref<3x32x32xf32, #tpu.memory_space<vmem>>, vector<1x32x32xf32>
    %28 = vector.shape_cast %27 : vector<1x32x32xf32> to vector<32x32xf32>
    %cst_25 = arith.constant dense<0.000000e+00> : vector<128x32xf32>
    %29 = tpu.matmul %26, %28, %cst_25 {dimension_numbers = #tpu.dot_dimension_numbers<[1], [0], [0], [1], [0, 0, 1, 1], [], []>} : vector<128x32xf32>, vector<32x32xf32>, vector<128x32xf32> -> vector<128x32xf32>
    %c0_26 = arith.constant 0 : index
    %c0_27 = arith.constant 0 : index
    %30 = vector.load %arg7[%c0_26, %c0_27] : memref<3x32xf32, #tpu.memory_space<vmem>>, vector<1x32xf32>
    %31 = vector.shape_cast %30 : vector<1x32xf32> to vector<32xf32>
    %32 = vector.shape_cast %31 : vector<32xf32> to vector<1x32xf32>
    %33 = vector.broadcast %32 : vector<1x32xf32> to vector<128x32xf32>
    %34 = arith.addf %29, %33 : vector<128x32xf32>
    %35 = arith.addf %7, %34 : vector<128x32xf32>
    %36 = vector.shape_cast %35 : vector<128x32xf32> to vector<2x64x32xf32>
    %c0_28 = arith.constant 0 : index
    %c8_29 = arith.constant 8 : index
    %c0_30 = arith.constant 0 : index
    %37 = vector.load %arg11[%c0_28, %c8_29, %c0_30] : memref<2x80x32xf32, #tpu.memory_space<vmem>>, vector<2x64x32xf32>
    tpu.vector_store %arg11[%c0_28, %c8_29, %c0_30], %36 {strides = array<i32>} : memref<2x80x32xf32, #tpu.memory_space<vmem>>, vector<2x64x32xf32>,
    %c0_31 = arith.constant 0 : index
    %c6 = arith.constant 6 : index
    %c0_32 = arith.constant 0 : index
    %38 = vector.load %arg11[%c0_31, %c6, %c0_32] : memref<2x80x32xf32, #tpu.memory_space<vmem>>, vector<2x64x32xf32>
    %39 = vector.shape_cast %38 : vector<2x64x32xf32> to vector<128x32xf32>
    %c0_33 = arith.constant 0 : index
    %c10 = arith.constant 10 : index
    %c0_34 = arith.constant 0 : index
    %40 = vector.load %arg11[%c0_33, %c10, %c0_34] : memref<2x80x32xf32, #tpu.memory_space<vmem>>, vector<2x64x32xf32>
    %41 = vector.shape_cast %40 : vector<2x64x32xf32> to vector<128x32xf32>
    %42 = tpu.concatenate %39, %35, %41 in 1 : vector<128x32xf32>, vector<128x32xf32>, vector<128x32xf32> -> vector<128x96xf32>
    %c1 = arith.constant 1 : index
    %c0_35 = arith.constant 0 : index
    %c0_36 = arith.constant 0 : index
    %43 = vector.load %arg4[%c1, %c0_35, %c0_36] : memref<3x96x32xf32, #tpu.memory_space<vmem>>, vector<1x96x32xf32>
    %44 = vector.shape_cast %43 : vector<1x96x32xf32> to vector<96x32xf32>
    %cst_37 = arith.constant dense<0.000000e+00> : vector<128x32xf32>
    %45 = tpu.matmul %42, %44, %cst_37 {dimension_numbers = #tpu.dot_dimension_numbers<[1], [0], [0], [1], [0, 0, 1, 1], [], []>} : vector<128x96xf32>, vector<96x32xf32>, vector<128x32xf32> -> vector<128x32xf32>
    %c1_38 = arith.constant 1 : index
    %c0_39 = arith.constant 0 : index
    %46 = vector.load %arg5[%c1_38, %c0_39] : memref<3x32xf32, #tpu.memory_space<vmem>>, vector<1x32xf32>
    %47 = vector.shape_cast %46 : vector<1x32xf32> to vector<32xf32>
    %48 = vector.shape_cast %47 : vector<32xf32> to vector<1x32xf32>
    %49 = vector.broadcast %48 : vector<1x32xf32> to vector<128x32xf32>
    %50 = arith.addf %45, %49 : vector<128x32xf32>
    %cst_40 = arith.constant 0.000000e+00 : f32
    %51 = vector.broadcast %cst_40 : f32 to vector<128x32xf32>
    %52 = arith.maximumf %50, %51 : vector<128x32xf32>
    %c1_41 = arith.constant 1 : index
    %c0_42 = arith.constant 0 : index
    %c0_43 = arith.constant 0 : index
    %53 = vector.load %arg6[%c1_41, %c0_42, %c0_43] : memref<3x32x32xf32, #tpu.memory_space<vmem>>, vector<1x32x32xf32>
    %54 = vector.shape_cast %53 : vector<1x32x32xf32> to vector<32x32xf32>
    %cst_44 = arith.constant dense<0.000000e+00> : vector<128x32xf32>
    %55 = tpu.matmul %52, %54, %cst_44 {dimension_numbers = #tpu.dot_dimension_numbers<[1], [0], [0], [1], [0, 0, 1, 1], [], []>} : vector<128x32xf32>, vector<32x32xf32>, vector<128x32xf32> -> vector<128x32xf32>
    %c1_45 = arith.constant 1 : index
    %c0_46 = arith.constant 0 : index
    %56 = vector.load %arg7[%c1_45, %c0_46] : memref<3x32xf32, #tpu.memory_space<vmem>>, vector<1x32xf32>
    %57 = vector.shape_cast %56 : vector<1x32xf32> to vector<32xf32>
    %58 = vector.shape_cast %57 : vector<32xf32> to vector<1x32xf32>
    %59 = vector.broadcast %58 : vector<1x32xf32> to vector<128x32xf32>
    %60 = arith.addf %55, %59 : vector<128x32xf32>
    %61 = arith.addf %35, %60 : vector<128x32xf32>
    %62 = vector.shape_cast %61 : vector<128x32xf32> to vector<2x64x32xf32>
    %c0_47 = arith.constant 0 : index
    %c8_48 = arith.constant 8 : index
    %c0_49 = arith.constant 0 : index
    %63 = vector.load %arg11[%c0_47, %c8_48, %c0_49] : memref<2x80x32xf32, #tpu.memory_space<vmem>>, vector<2x64x32xf32>
    tpu.vector_store %arg11[%c0_47, %c8_48, %c0_49], %62 {strides = array<i32>} : memref<2x80x32xf32, #tpu.memory_space<vmem>>, vector<2x64x32xf32>,
    %c0_50 = arith.constant 0 : index
    %c4 = arith.constant 4 : index
    %c0_51 = arith.constant 0 : index
    %64 = vector.load %arg11[%c0_50, %c4, %c0_51] : memref<2x80x32xf32, #tpu.memory_space<vmem>>, vector<2x64x32xf32>
    %65 = vector.shape_cast %64 : vector<2x64x32xf32> to vector<128x32xf32>
    %c0_52 = arith.constant 0 : index
    %c12 = arith.constant 12 : index
    %c0_53 = arith.constant 0 : index
    %66 = vector.load %arg11[%c0_52, %c12, %c0_53] : memref<2x80x32xf32, #tpu.memory_space<vmem>>, vector<2x64x32xf32>
    %67 = vector.shape_cast %66 : vector<2x64x32xf32> to vector<128x32xf32>
    %68 = tpu.concatenate %65, %61, %67 in 1 : vector<128x32xf32>, vector<128x32xf32>, vector<128x32xf32> -> vector<128x96xf32>
    %c2 = arith.constant 2 : index
    %c0_54 = arith.constant 0 : index
    %c0_55 = arith.constant 0 : index
    %69 = vector.load %arg4[%c2, %c0_54, %c0_55] : memref<3x96x32xf32, #tpu.memory_space<vmem>>, vector<1x96x32xf32>
    %70 = vector.shape_cast %69 : vector<1x96x32xf32> to vector<96x32xf32>
    %cst_56 = arith.constant dense<0.000000e+00> : vector<128x32xf32>
    %71 = tpu.matmul %68, %70, %cst_56 {dimension_numbers = #tpu.dot_dimension_numbers<[1], [0], [0], [1], [0, 0, 1, 1], [], []>} : vector<128x96xf32>, vector<96x32xf32>, vector<128x32xf32> -> vector<128x32xf32>
    %c2_57 = arith.constant 2 : index
    %c0_58 = arith.constant 0 : index
    %72 = vector.load %arg5[%c2_57, %c0_58] : memref<3x32xf32, #tpu.memory_space<vmem>>, vector<1x32xf32>
    %73 = vector.shape_cast %72 : vector<1x32xf32> to vector<32xf32>
    %74 = vector.shape_cast %73 : vector<32xf32> to vector<1x32xf32>
    %75 = vector.broadcast %74 : vector<1x32xf32> to vector<128x32xf32>
    %76 = arith.addf %71, %75 : vector<128x32xf32>
    %cst_59 = arith.constant 0.000000e+00 : f32
    %77 = vector.broadcast %cst_59 : f32 to vector<128x32xf32>
    %78 = arith.maximumf %76, %77 : vector<128x32xf32>
    %c2_60 = arith.constant 2 : index
    %c0_61 = arith.constant 0 : index
    %c0_62 = arith.constant 0 : index
    %79 = vector.load %arg6[%c2_60, %c0_61, %c0_62] : memref<3x32x32xf32, #tpu.memory_space<vmem>>, vector<1x32x32xf32>
    %80 = vector.shape_cast %79 : vector<1x32x32xf32> to vector<32x32xf32>
    %cst_63 = arith.constant dense<0.000000e+00> : vector<128x32xf32>
    %81 = tpu.matmul %78, %80, %cst_63 {dimension_numbers = #tpu.dot_dimension_numbers<[1], [0], [0], [1], [0, 0, 1, 1], [], []>} : vector<128x32xf32>, vector<32x32xf32>, vector<128x32xf32> -> vector<128x32xf32>
    %c2_64 = arith.constant 2 : index
    %c0_65 = arith.constant 0 : index
    %82 = vector.load %arg7[%c2_64, %c0_65] : memref<3x32xf32, #tpu.memory_space<vmem>>, vector<1x32xf32>
    %83 = vector.shape_cast %82 : vector<1x32xf32> to vector<32xf32>
    %84 = vector.shape_cast %83 : vector<32xf32> to vector<1x32xf32>
    %85 = vector.broadcast %84 : vector<1x32xf32> to vector<128x32xf32>
    %86 = arith.addf %81, %85 : vector<128x32xf32>
    %87 = arith.addf %61, %86 : vector<128x32xf32>
    %c0_66 = arith.constant 0 : index
    %c0_67 = arith.constant 0 : index
    %88 = vector.load %arg8[%c0_66, %c0_67] : memref<32x128xf32, #tpu.memory_space<vmem>>, vector<32x128xf32>
    %cst_68 = arith.constant dense<0.000000e+00> : vector<128x128xf32>
    %89 = tpu.matmul %87, %88, %cst_68 {dimension_numbers = #tpu.dot_dimension_numbers<[1], [0], [0], [1], [0, 0, 1, 1], [], []>} : vector<128x32xf32>, vector<32x128xf32>, vector<128x128xf32> -> vector<128x128xf32>
    %c0_69 = arith.constant 0 : index
    %c0_70 = arith.constant 0 : index
    %90 = vector.load %arg9[%c0_69, %c0_70] : memref<1x128xf32, #tpu.memory_space<vmem>>, vector<1x128xf32>
    %91 = vector.shape_cast %90 : vector<1x128xf32> to vector<128xf32>
    %92 = vector.shape_cast %91 : vector<128xf32> to vector<1x128xf32>
    %93 = vector.broadcast %92 : vector<1x128xf32> to vector<128x128xf32>
    %94 = arith.addf %89, %93 : vector<128x128xf32>
    %c0_71 = arith.constant 0 : index
    %c0_72 = arith.constant 0 : index
    %95 = vector.load %arg10[%c0_71, %c0_72] : memref<128x128xf32, #tpu.memory_space<vmem>>, vector<128x128xf32>
    tpu.vector_store %arg10[%c0_71, %c0_72], %94 {strides = array<i32>} : memref<128x128xf32, #tpu.memory_space<vmem>>, vector<128x128xf32>,
    return
  }
  func.func @transform_0(%arg0: i32) -> (i32, i32) {
    %c0_i32 = arith.constant 0 : i32
    %c0_i32_0 = arith.constant 0 : i32
    %c0_i32_1 = arith.constant 0 : i32
    return %c0_i32, %c0_i32_0 : i32, i32
  }
  func.func @transform_1(%arg0: i32) -> (i32, i32) {
    %c0_i32 = arith.constant 0 : i32
    %c0_i32_0 = arith.constant 0 : i32
    %c0_i32_1 = arith.constant 0 : i32
    return %c0_i32, %c0_i32_0 : i32, i32
  }
  func.func @transform_2(%arg0: i32) -> (i32, i32) {
    %c0_i32 = arith.constant 0 : i32
    %c0_i32_0 = arith.constant 0 : i32
    %c0_i32_1 = arith.constant 0 : i32
    return %c0_i32, %c0_i32_0 : i32, i32
  }
  func.func @transform_3(%arg0: i32) -> (i32, i32, i32) {
    %c0_i32 = arith.constant 0 : i32
    %c0_i32_0 = arith.constant 0 : i32
    %c0_i32_1 = arith.constant 0 : i32
    %c0_i32_2 = arith.constant 0 : i32
    return %c0_i32, %c0_i32_0, %c0_i32_1 : i32, i32, i32
  }
  func.func @transform_4(%arg0: i32) -> (i32, i32) {
    %c0_i32 = arith.constant 0 : i32
    %c0_i32_0 = arith.constant 0 : i32
    %c0_i32_1 = arith.constant 0 : i32
    return %c0_i32, %c0_i32_0 : i32, i32
  }
  func.func @transform_5(%arg0: i32) -> (i32, i32, i32) {
    %c0_i32 = arith.constant 0 : i32
    %c0_i32_0 = arith.constant 0 : i32
    %c0_i32_1 = arith.constant 0 : i32
    %c0_i32_2 = arith.constant 0 : i32
    return %c0_i32, %c0_i32_0, %c0_i32_1 : i32, i32, i32
  }
  func.func @transform_6(%arg0: i32) -> (i32, i32) {
    %c0_i32 = arith.constant 0 : i32
    %c0_i32_0 = arith.constant 0 : i32
    %c0_i32_1 = arith.constant 0 : i32
    return %c0_i32, %c0_i32_0 : i32, i32
  }
  func.func @transform_7(%arg0: i32) -> (i32, i32) {
    %c0_i32 = arith.constant 0 : i32
    %c0_i32_0 = arith.constant 0 : i32
    %c0_i32_1 = arith.constant 0 : i32
    return %c0_i32, %c0_i32_0 : i32, i32
  }
  func.func @transform_8(%arg0: i32) -> (i32, i32) {
    %c0_i32 = arith.constant 0 : i32
    %c0_i32_0 = arith.constant 0 : i32
    %c0_i32_1 = arith.constant 0 : i32
    return %c0_i32, %c0_i32_0 : i32, i32
  }
  func.func @transform_9(%arg0: i32) -> (i32, i32) {
    %c0_i32 = arith.constant 0 : i32
    %c0_i32_0 = arith.constant 0 : i32
    %c0_i32_1 = arith.constant 0 : i32
    return %c0_i32, %c0_i32_0 : i32, i32
  }
}

</mosaic_0001>

<llo_original>
// kernel: tpu_custom_call.1
$region0: #{tpu_custom_call.1}
  #allocation0 [shape = 'u32[]', space=smem, size = 0x4, offset = 0x4, fixed_abs, tag = 'smem constant byte address 0x4 - core index']
  #allocation1 [shape = 'u32[144,128]{1,0:T(1,128)}', space=vmem, size = 0x12000, scoped, tag = 'internal scratch']
  #allocation2 [shape = 'f32[2,80,32]{2,1,0:T(8,128)}', space=vmem, size = 0x14000, scoped, tag = 'scratch operand']
  %s0 = inlined_call_operand.vmem [shape: f32[128,16], index: 0, kind: input, shape index: {}]
  %s1 = inlined_call_operand.vmem [shape: f32[16,32], index: 1, kind: input, shape index: {}]
  %s2 = inlined_call_operand.vmem [shape: f32[1,32], index: 2, kind: input, shape index: {}]
  %s3 = inlined_call_operand.vmem [shape: f32[3,96,32], index: 3, kind: input, shape index: {}]
  %s4 = inlined_call_operand.vmem [shape: f32[3,32], index: 4, kind: input, shape index: {}]
  %s5 = inlined_call_operand.vmem [shape: f32[3,32,32], index: 5, kind: input, shape index: {}]
  %s6 = inlined_call_operand.vmem [shape: f32[3,32], index: 6, kind: input, shape index: {}]
  %s7 = inlined_call_operand.vmem [shape: f32[32,128], index: 7, kind: input, shape index: {}]
  %s8 = inlined_call_operand.vmem [shape: f32[1,128], index: 8, kind: input, shape index: {}]
  %s9 = inlined_call_operand.hbm [shape: f32[128,128], index: 9, kind: output, shape index: {}]
  %s10 = sld [smem:[#allocation0]]
  $region46: #{tpu_custom_call.1} parent=0
    _
  %s12 = ssub.s32 1, %s10
  %s13 = scalar_select 0, %s12, %s10
  $region1: #{tpu_custom_call.1} parent=0
    #allocation3 [shape = 'u8[65536]{0}', space=vmem, size = 0x10000, scoped, tag = 'output window, operand 0, single buffered']
    #allocation4 [shape = 's32[1]{0}', space=sflag, size = 0x4, scoped, tag = 'scoped memory for tpu_custom_call.1']
    %14 = vsyncpa [#allocation4], 0
    // Predicated region
    $region2: #{tpu_custom_call.1} parent=1 // pred_check
      _
    $region3: #{tpu_custom_call.1} parent=1 // pred_check_branch
      %16 = sbr.rel (0) target = $region5
    $region4: #{tpu_custom_call.1} parent=1 // pred_region
      _
    $region5: #{tpu_custom_call.1} parent=1 // pred_fallthru
      _
    // Predicated region
    $region6: #{tpu_custom_call.1} parent=1 // pred_check
      _
    $region7: #{tpu_custom_call.1} parent=1 // pred_check_branch
      %18 = sbr.rel (0) target = $region9
    $region8: #{tpu_custom_call.1} parent=1 // pred_region
      _
    $region9: #{tpu_custom_call.1} parent=1 // pred_fallthru
      _
    // Predicated region
    $region10: #{tpu_custom_call.1} parent=1 // pred_check
      _
    $region11: #{tpu_custom_call.1} parent=1 // pred_check_branch
      %20 = sbr.rel (0) target = $region13
    $region12: #{tpu_custom_call.1} parent=1 // pred_region
      _
    $region13: #{tpu_custom_call.1} parent=1 // pred_fallthru
      _
    // Predicated region
    $region14: #{tpu_custom_call.1} parent=1 // pred_check
      _
    $region15: #{tpu_custom_call.1} parent=1 // pred_check_branch
      %22 = sbr.rel (0) target = $region17
    $region16: #{tpu_custom_call.1} parent=1 // pred_region
      _
    $region17: #{tpu_custom_call.1} parent=1 // pred_fallthru
      _
    // Predicated region
    $region18: #{tpu_custom_call.1} parent=1 // pred_check
      _
    $region19: #{tpu_custom_call.1} parent=1 // pred_check_branch
      %24 = sbr.rel (0) target = $region21
    $region20: #{tpu_custom_call.1} parent=1 // pred_region
      _
    $region21: #{tpu_custom_call.1} parent=1 // pred_fallthru
      _
    // Predicated region
    $region22: #{tpu_custom_call.1} parent=1 // pred_check
      _
    $region23: #{tpu_custom_call.1} parent=1 // pred_check_branch
      %26 = sbr.rel (0) target = $region25
    $region24: #{tpu_custom_call.1} parent=1 // pred_region
      _
    $region25: #{tpu_custom_call.1} parent=1 // pred_fallthru
      _
    // Predicated region
    $region26: #{tpu_custom_call.1} parent=1 // pred_check
      _
    $region27: #{tpu_custom_call.1} parent=1 // pred_check_branch
      %28 = sbr.rel (0) target = $region29
    $region28: #{tpu_custom_call.1} parent=1 // pred_region
      _
    $region29: #{tpu_custom_call.1} parent=1 // pred_fallthru
      _
    // Predicated region
    $region30: #{tpu_custom_call.1} parent=1 // pred_check
      _
    $region31: #{tpu_custom_call.1} parent=1 // pred_check_branch
      %30 = sbr.rel (0) target = $region33
    $region32: #{tpu_custom_call.1} parent=1 // pred_region
      _
    $region33: #{tpu_custom_call.1} parent=1 // pred_fallthru
      _
    // Predicated region
    $region34: #{tpu_custom_call.1} parent=1 // pred_check
      _
    $region35: #{tpu_custom_call.1} parent=1 // pred_check_branch
      %32 = sbr.rel (0) target = $region37
    $region36: #{tpu_custom_call.1} parent=1 // pred_region
      _
    $region37: #{tpu_custom_call.1} parent=1 // pred_fallthru
      _
    %v33 = vld [vmem:[%s0] sm:$0xff]
    %v34 = vld [vmem:[%s0 + $0x8] sm:$0xff]
    %v35 = vld [vmem:[%s0 + $0x10] sm:$0xff]
    %v36 = vld [vmem:[%s0 + $0x18] sm:$0xff]
    %v37 = vld [vmem:[%s0 + $0x20] sm:$0xff]
    %v38 = vld [vmem:[%s0 + $0x28] sm:$0xff]
    %v39 = vld [vmem:[%s0 + $0x30] sm:$0xff]
    %v40 = vld [vmem:[%s0 + $0x38] sm:$0xff]
    %v41 = vld [vmem:[%s0 + $0x40] sm:$0xff]
    %v42 = vld [vmem:[%s0 + $0x48] sm:$0xff]
    %v43 = vld [vmem:[%s0 + $0x50] sm:$0xff]
    %v44 = vld [vmem:[%s0 + $0x58] sm:$0xff]
    %v45 = vld [vmem:[%s0 + $0x60] sm:$0xff]
    %v46 = vld [vmem:[%s0 + $0x68] sm:$0xff]
    %v47 = vld [vmem:[%s0 + $0x70] sm:$0xff]
    %v48 = vld [vmem:[%s0 + $0x78] sm:$0xff]
    %v49 = vld [vmem:[%s1] sm:$0xff]
    %v50 = vld [vmem:[%s1 + $0x8] sm:$0xff]
    %v51 = vld [vmem:[%s2] sm:$0x1]
    %v53 = vlaneseq
    %v54 = vshrl.u32 %v53, 7
    %v55 = vsub.s32 0, %v54
    %v56 = vrot.slane %v51, %v55
    %vm58 = vcmask 130048
    %v60 = vsel %vm58, %v33, 0
    %v63 = vsel %vm58, %v34, 0
    %v66 = vsel %vm58, %v35, 0
    %v69 = vsel %vm58, %v36, 0
    %v72 = vsel %vm58, %v37, 0
    %v75 = vsel %vm58, %v38, 0
    %v78 = vsel %vm58, %v39, 0
    %v81 = vsel %vm58, %v40, 0
    %v84 = vsel %vm58, %v41, 0
    %v87 = vsel %vm58, %v42, 0
    %v90 = vsel %vm58, %v43, 0
    %v93 = vsel %vm58, %v44, 0
    %v96 = vsel %vm58, %v45, 0
    %v99 = vsel %vm58, %v46, 0
    %v102 = vsel %vm58, %v47, 0
    %v105 = vsel %vm58, %v48, 0
    %107 = vmatprep.subr.mxu0 0.0
    %108 = vmatpush1.msra.mxu0 0.0
    %109 = vmatprep.subr.mxu0 0.0
    %110 = vmatpush1.msra.mxu0 0.0
    %111 = vmatprep.subr.mxu0 0.0
    %112 = vmatpush1.msra.mxu0 0.0
    %113 = vmatprep.subr.mxu0 0.0
    %114 = vmatpush1.msra.mxu0 0.0
    %115 = vmatprep.subr.mxu0 0.0
    %116 = vmatpush1.msra.mxu0 0.0
    %117 = vmatprep.subr.mxu0 0.0
    %118 = vmatpush1.msra.mxu0 0.0
    %119 = vmatprep.subr.mxu0 0.0
    %120 = vmatpush1.msra.mxu0 0.0
    %121 = vmatprep.subr.mxu0 0.0
    %122 = vmatpush1.msra.mxu0 0.0
    %123 = vmatprep.subr.mxu0 0.0
    %124 = vmatpush1.msra.mxu0 0.0
    %125 = vmatprep.subr.mxu0 0.0
    %126 = vmatpush1.msra.mxu0 0.0
    %127 = vmatprep.subr.mxu0 0.0
    %128 = vmatpush1.msra.mxu0 0.0
    %129 = vmatprep.subr.mxu0 0.0
    %130 = vmatpush1.msra.mxu0 0.0
    %131 = vmatprep.subr.mxu0 0.0
    %132 = vmatpush1.msra.mxu0 0.0
    %133 = vmatprep.subr.mxu0 0.0
    %134 = vmatpush1.msra.mxu0 0.0
    %135 = vmatprep.subr.mxu0 0.0
    %136 = vmatpush1.msra.mxu0 %v50
    %137 = vmatprep.subr.mxu0 0.0
    %138 = vmatpush1.msra.mxu0 %v49
    %139 = vmatprep.subr.mxu0 0.0
    %140 = vmatpush2.msra.mxu0 0.0
    %141 = vmatprep.subr.mxu0 0.0
    %142 = vmatpush2.msra.mxu0 0.0
    %143 = vmatprep.subr.mxu0 0.0
    %144 = vmatpush2.msra.mxu0 0.0
    %145 = vmatprep.subr.mxu0 0.0
    %146 = vmatpush2.msra.mxu0 0.0
    %147 = vmatprep.subr.mxu0 0.0
    %148 = vmatpush2.msra.mxu0 0.0
    %149 = vmatprep.subr.mxu0 0.0
    %150 = vmatpush2.msra.mxu0 0.0
    %151 = vmatprep.subr.mxu0 0.0
    %152 = vmatpush2.msra.mxu0 0.0
    %153 = vmatprep.subr.mxu0 0.0
    %154 = vmatpush2.msra.mxu0 0.0
    %155 = vmatprep.subr.mxu0 0.0
    %156 = vmatpush2.msra.mxu0 0.0
    %157 = vmatprep.subr.mxu0 0.0
    %158 = vmatpush2.msra.mxu0 0.0
    %159 = vmatprep.subr.mxu0 0.0
    %160 = vmatpush2.msra.mxu0 0.0
    %161 = vmatprep.subr.mxu0 0.0
    %162 = vmatpush2.msra.mxu0 0.0
    %163 = vmatprep.subr.mxu0 0.0
    %164 = vmatpush2.msra.mxu0 0.0
    %165 = vmatprep.subr.mxu0 0.0
    %166 = vmatpush2.msra.mxu0 0.0
    %167 = vmatprep.subr.mxu0 0.0
    %168 = vmatpush2.msra.mxu0 0.0
    %169 = vmatprep.subr.mxu0 0.0
    %170 = vmatpush2.msra.mxu0 0.0
    %171 = vmatprep.mubr.f32.mxu0 0.0
    %172 = vmatmul.mubr.f32.gmra.mxu0 %v60
    %v173 = vpop.f32.mrf.mxu0
    %v174 = vadd.f32 %v56, %v173
    %v175 = vpop.f32.mrf.mxu0
    %176 = vmatprep.mubr.f32.mxu0 0.0
    %177 = vmatmul.mubr.f32.gmra.mxu0 %v63
    %v178 = vpop.f32.mrf.mxu0
    %v179 = vadd.f32 %v56, %v178
    %v180 = vpop.f32.mrf.mxu0
    %181 = vmatprep.mubr.f32.mxu0 0.0
    %182 = vmatmul.mubr.f32.gmra.mxu0 %v66
    %v183 = vpop.f32.mrf.mxu0
    %v184 = vadd.f32 %v56, %v183
    %v185 = vpop.f32.mrf.mxu0
    %186 = vmatprep.mubr.f32.mxu0 0.0
    %187 = vmatmul.mubr.f32.gmra.mxu0 %v69
    %v188 = vpop.f32.mrf.mxu0
    %v189 = vadd.f32 %v56, %v188
    %v190 = vpop.f32.mrf.mxu0
    %191 = vmatprep.mubr.f32.mxu0 0.0
    %192 = vmatmul.mubr.f32.gmra.mxu0 %v72
    %v193 = vpop.f32.mrf.mxu0
    %v194 = vadd.f32 %v56, %v193
    %v195 = vpop.f32.mrf.mxu0
    %196 = vmatprep.mubr.f32.mxu0 0.0
    %197 = vmatmul.mubr.f32.gmra.mxu0 %v75
    %v198 = vpop.f32.mrf.mxu0
    %v199 = vadd.f32 %v56, %v198
    %v200 = vpop.f32.mrf.mxu0
    %201 = vmatprep.mubr.f32.mxu0 0.0
    %202 = vmatmul.mubr.f32.gmra.mxu0 %v78
    %v203 = vpop.f32.mrf.mxu0
    %v204 = vadd.f32 %v56, %v203
    %v205 = vpop.f32.mrf.mxu0
    %206 = vmatprep.mubr.f32.mxu0 0.0
    %207 = vmatmul.mubr.f32.gmra.mxu0 %v81
    %v208 = vpop.f32.mrf.mxu0
    %v209 = vadd.f32 %v56, %v208
    %v210 = vpop.f32.mrf.mxu0
    %211 = vmatprep.mubr.f32.mxu0 0.0
    %212 = vmatmul.mubr.f32.gmra.mxu0 %v84
    %v213 = vpop.f32.mrf.mxu0
    %v214 = vadd.f32 %v56, %v213
    %v215 = vpop.f32.mrf.mxu0
    %216 = vmatprep.mubr.f32.mxu0 0.0
    %217 = vmatmul.mubr.f32.gmra.mxu0 %v87
    %v218 = vpop.f32.mrf.mxu0
    %v219 = vadd.f32 %v56, %v218
    %v220 = vpop.f32.mrf.mxu0
    %221 = vmatprep.mubr.f32.mxu0 0.0
    %222 = vmatmul.mubr.f32.gmra.mxu0 %v90
    %v223 = vpop.f32.mrf.mxu0
    %v224 = vadd.f32 %v56, %v223
    %v225 = vpop.f32.mrf.mxu0
    %226 = vmatprep.mubr.f32.mxu0 0.0
    %227 = vmatmul.mubr.f32.gmra.mxu0 %v93
    %v228 = vpop.f32.mrf.mxu0
    %v229 = vadd.f32 %v56, %v228
    %v230 = vpop.f32.mrf.mxu0
    %231 = vmatprep.mubr.f32.mxu0 0.0
    %232 = vmatmul.mubr.f32.gmra.mxu0 %v96
    %v233 = vpop.f32.mrf.mxu0
    %v234 = vadd.f32 %v56, %v233
    %v235 = vpop.f32.mrf.mxu0
    %236 = vmatprep.mubr.f32.mxu0 0.0
    %237 = vmatmul.mubr.f32.gmra.mxu0 %v99
    %v238 = vpop.f32.mrf.mxu0
    %v239 = vadd.f32 %v56, %v238
    %v240 = vpop.f32.mrf.mxu0
    %241 = vmatprep.mubr.f32.mxu0 0.0
    %242 = vmatmul.mubr.f32.gmra.mxu0 %v102
    %v243 = vpop.f32.mrf.mxu0
    %v244 = vadd.f32 %v56, %v243
    %v245 = vpop.f32.mrf.mxu0
    %246 = vmatprep.mubr.f32.mxu0 0.0
    %247 = vmatmul.mubr.f32.gmra.mxu0 %v105
    %v248 = vpop.f32.mrf.mxu0
    %v249 = vadd.f32 %v56, %v248
    %v250 = vpop.f32.mrf.mxu0
    %251 = vdwg.mxu0
    %vm252 = vcmask 261120
    %253 = vst.msk [vmem:[#allocation2] sm:$0xff] %vm252, 0.0
    %254 = vst.msk [vmem:[#allocation2 + $0x8] sm:$0xff] %vm252, 0.0
    %255 = vst.msk [vmem:[#allocation2 + $0x10] sm:$0xff] %vm252, 0.0
    %256 = vst.msk [vmem:[#allocation2 + $0x18] sm:$0xff] %vm252, 0.0
    %257 = vst.msk [vmem:[#allocation2 + $0x20] sm:$0xff] %vm252, 0.0
    %258 = vst.msk [vmem:[#allocation2 + $0x28] sm:$0xff] %vm252, 0.0
    %259 = vst.msk [vmem:[#allocation2 + $0x30] sm:$0xff] %vm252, 0.0
    %260 = vst.msk [vmem:[#allocation2 + $0x38] sm:$0xff] %vm252, 0.0
    %261 = vst.msk [vmem:[#allocation2 + $0x40] sm:$0xff] %vm252, 0.0
    %262 = vst.msk [vmem:[#allocation2 + $0x48] sm:$0xff] %vm252, 0.0
    %263 = vst.msk [vmem:[#allocation2 + $0x50] sm:$0xff] %vm252, 0.0
    %264 = vst.msk [vmem:[#allocation2 + $0x58] sm:$0xff] %vm252, 0.0
    %265 = vst.msk [vmem:[#allocation2 + $0x60] sm:$0xff] %vm252, 0.0
    %266 = vst.msk [vmem:[#allocation2 + $0x68] sm:$0xff] %vm252, 0.0
    %267 = vst.msk [vmem:[#allocation2 + $0x70] sm:$0xff] %vm252, 0.0
    %268 = vst.msk [vmem:[#allocation2 + $0x78] sm:$0xff] %vm252, 0.0
    %269 = vst.msk [vmem:[#allocation2 + $0x80] sm:$0xff] %vm252, 0.0
    %270 = vst.msk [vmem:[#allocation2 + $0x88] sm:$0xff] %vm252, 0.0
    %271 = vst.msk [vmem:[#allocation2 + $0x90] sm:$0xff] %vm252, 0.0
    %272 = vst.msk [vmem:[#allocation2 + $0x98] sm:$0xff] %vm252, 0.0
    %273 = vst.msk [vmem:[#allocation2 + $0x8] sm:$0xff] %vm252, %v174
    %274 = vst.msk [vmem:[#allocation2 + $0x10] sm:$0xff] %vm252, %v179
    %275 = vst.msk [vmem:[#allocation2 + $0x18] sm:$0xff] %vm252, %v184
    %276 = vst.msk [vmem:[#allocation2 + $0x20] sm:$0xff] %vm252, %v189
    %277 = vst.msk [vmem:[#allocation2 + $0x28] sm:$0xff] %vm252, %v194
    %278 = vst.msk [vmem:[#allocation2 + $0x30] sm:$0xff] %vm252, %v199
    %279 = vst.msk [vmem:[#allocation2 + $0x38] sm:$0xff] %vm252, %v204
    %280 = vst.msk [vmem:[#allocation2 + $0x40] sm:$0xff] %vm252, %v209
    %281 = vst.msk [vmem:[#allocation2 + $0x58] sm:$0xff] %vm252, %v214
    %282 = vst.msk [vmem:[#allocation2 + $0x60] sm:$0xff] %vm252, %v219
    %283 = vst.msk [vmem:[#allocation2 + $0x68] sm:$0xff] %vm252, %v224
    %284 = vst.msk [vmem:[#allocation2 + $0x70] sm:$0xff] %vm252, %v229
    %285 = vst.msk [vmem:[#allocation2 + $0x78] sm:$0xff] %vm252, %v234
    %286 = vst.msk [vmem:[#allocation2 + $0x80] sm:$0xff] %vm252, %v239
    %287 = vst.msk [vmem:[#allocation2 + $0x88] sm:$0xff] %vm252, %v244
    %288 = vst.msk [vmem:[#allocation2 + $0x90] sm:$0xff] %vm252, %v249
    %v289 = vld [vmem:[#allocation2 + $0x7] sm:$0xff]
    %v290 = vld [vmem:[#allocation2 + $0xf] sm:$0xff]
    %v291 = vld [vmem:[#allocation2 + $0x17] sm:$0xff]
    %v292 = vld [vmem:[#allocation2 + $0x1f] sm:$0xff]
    %v293 = vld [vmem:[#allocation2 + $0x27] sm:$0xff]
    %v294 = vld [vmem:[#allocation2 + $0x2f] sm:$0xff]
    %v295 = vld [vmem:[#allocation2 + $0x37] sm:$0xff]
    %v296 = vld [vmem:[#allocation2 + $0x3f] sm:$0xff]
    %v297 = vld [vmem:[#allocation2 + $0x57] sm:$0xff]
    %v298 = vld [vmem:[#allocation2 + $0x5f] sm:$0xff]
    %v299 = vld [vmem:[#allocation2 + $0x67] sm:$0xff]
    %v300 = vld [vmem:[#allocation2 + $0x6f] sm:$0xff]
    %v301 = vld [vmem:[#allocation2 + $0x77] sm:$0xff]
    %v302 = vld [vmem:[#allocation2 + $0x7f] sm:$0xff]
    %v303 = vld [vmem:[#allocation2 + $0x87] sm:$0xff]
    %v304 = vld [vmem:[#allocation2 + $0x8f] sm:$0xff]
    %v305 = vld [vmem:[#allocation2 + $0x9] sm:$0xff]
    %v306 = vld [vmem:[#allocation2 + $0x11] sm:$0xff]
    %v307 = vld [vmem:[#allocation2 + $0x19] sm:$0xff]
    %v308 = vld [vmem:[#allocation2 + $0x21] sm:$0xff]
    %v309 = vld [vmem:[#allocation2 + $0x29] sm:$0xff]
    %v310 = vld [vmem:[#allocation2 + $0x31] sm:$0xff]
    %v311 = vld [vmem:[#allocation2 + $0x39] sm:$0xff]
    %v312 = vld [vmem:[#allocation2 + $0x41] sm:$0xff]
    %v313 = vld [vmem:[#allocation2 + $0x59] sm:$0xff]
    %v314 = vld [vmem:[#allocation2 + $0x61] sm:$0xff]
    %v315 = vld [vmem:[#allocation2 + $0x69] sm:$0xff]
    %v316 = vld [vmem:[#allocation2 + $0x71] sm:$0xff]
    %v317 = vld [vmem:[#allocation2 + $0x79] sm:$0xff]
    %v318 = vld [vmem:[#allocation2 + $0x81] sm:$0xff]
    %v319 = vld [vmem:[#allocation2 + $0x89] sm:$0xff]
    %v320 = vld [vmem:[#allocation2 + $0x91] sm:$0xff]
    %337 = vrot.lane.b32.xlu0 %v174, 32
    %v338 = vpop.permute.xlu0 %337
    %339 = vrot.lane.b32.xlu0 %v179, 32
    %v340 = vpop.permute.xlu0 %339
    %341 = vrot.lane.b32.xlu0 %v184, 32
    %v342 = vpop.permute.xlu0 %341
    %343 = vrot.lane.b32.xlu0 %v189, 32
    %v344 = vpop.permute.xlu0 %343
    %345 = vrot.lane.b32.xlu0 %v194, 32
    %v346 = vpop.permute.xlu0 %345
    %347 = vrot.lane.b32.xlu0 %v199, 32
    %v348 = vpop.permute.xlu0 %347
    %349 = vrot.lane.b32.xlu0 %v204, 32
    %v350 = vpop.permute.xlu0 %349
    %351 = vrot.lane.b32.xlu0 %v209, 32
    %v352 = vpop.permute.xlu0 %351
    %353 = vrot.lane.b32.xlu0 %v214, 32
    %v354 = vpop.permute.xlu0 %353
    %355 = vrot.lane.b32.xlu0 %v219, 32
    %v356 = vpop.permute.xlu0 %355
    %357 = vrot.lane.b32.xlu0 %v224, 32
    %v358 = vpop.permute.xlu0 %357
    %359 = vrot.lane.b32.xlu0 %v229, 32
    %v360 = vpop.permute.xlu0 %359
    %361 = vrot.lane.b32.xlu0 %v234, 32
    %v362 = vpop.permute.xlu0 %361
    %363 = vrot.lane.b32.xlu0 %v239, 32
    %v364 = vpop.permute.xlu0 %363
    %365 = vrot.lane.b32.xlu0 %v244, 32
    %v366 = vpop.permute.xlu0 %365
    %367 = vrot.lane.b32.xlu0 %v249, 32
    %v368 = vpop.permute.xlu0 %367
    %401 = vrot.lane.b32.xlu0 %v305, 64
    %v402 = vpop.permute.xlu0 %401
    %403 = vrot.lane.b32.xlu0 %v306, 64
    %v404 = vpop.permute.xlu0 %403
    %405 = vrot.lane.b32.xlu0 %v307, 64
    %v406 = vpop.permute.xlu0 %405
    %407 = vrot.lane.b32.xlu0 %v308, 64
    %v408 = vpop.permute.xlu0 %407
    %409 = vrot.lane.b32.xlu0 %v309, 64
    %v410 = vpop.permute.xlu0 %409
    %411 = vrot.lane.b32.xlu0 %v310, 64
    %v412 = vpop.permute.xlu0 %411
    %413 = vrot.lane.b32.xlu0 %v311, 64
    %v414 = vpop.permute.xlu0 %413
    %415 = vrot.lane.b32.xlu0 %v312, 64
    %v416 = vpop.permute.xlu0 %415
    %417 = vrot.lane.b32.xlu0 %v313, 64
    %v418 = vpop.permute.xlu0 %417
    %419 = vrot.lane.b32.xlu0 %v314, 64
    %v420 = vpop.permute.xlu0 %419
    %421 = vrot.lane.b32.xlu0 %v315, 64
    %v422 = vpop.permute.xlu0 %421
    %423 = vrot.lane.b32.xlu0 %v316, 64
    %v424 = vpop.permute.xlu0 %423
    %425 = vrot.lane.b32.xlu0 %v317, 64
    %v426 = vpop.permute.xlu0 %425
    %427 = vrot.lane.b32.xlu0 %v318, 64
    %v428 = vpop.permute.xlu0 %427
    %429 = vrot.lane.b32.xlu0 %v319, 64
    %v430 = vpop.permute.xlu0 %429
    %431 = vrot.lane.b32.xlu0 %v320, 64
    %v432 = vpop.permute.xlu0 %431
    %v449 = vsel %vm252, %v289, %v338
    %v450 = vsel %vm252, %v290, %v340
    %v451 = vsel %vm252, %v291, %v342
    %v452 = vsel %vm252, %v292, %v344
    %v453 = vsel %vm252, %v293, %v346
    %v454 = vsel %vm252, %v294, %v348
    %v455 = vsel %vm252, %v295, %v350
    %v456 = vsel %vm252, %v296, %v352
    %v457 = vsel %vm252, %v297, %v354
    %v458 = vsel %vm252, %v298, %v356
    %v459 = vsel %vm252, %v299, %v358
    %v460 = vsel %vm252, %v300, %v360
    %v461 = vsel %vm252, %v301, %v362
    %v462 = vsel %vm252, %v302, %v364
    %v463 = vsel %vm252, %v303, %v366
    %v464 = vsel %vm252, %v304, %v368
    %vm465 = vcmask 523264
    %v466 = vsel %vm465, %v449, %v402
    %v467 = vsel %vm465, %v450, %v404
    %v468 = vsel %vm465, %v451, %v406
    %v469 = vsel %vm465, %v452, %v408
    %v470 = vsel %vm465, %v453, %v410
    %v471 = vsel %vm465, %v454, %v412
    %v472 = vsel %vm465, %v455, %v414
    %v473 = vsel %vm465, %v456, %v416
    %v474 = vsel %vm465, %v457, %v418
    %v475 = vsel %vm465, %v458, %v420
    %v476 = vsel %vm465, %v459, %v422
    %v477 = vsel %vm465, %v460, %v424
    %v478 = vsel %vm465, %v461, %v426
    %v479 = vsel %vm465, %v462, %v428
    %v480 = vsel %vm465, %v463, %v430
    %v481 = vsel %vm465, %v464, %v432
    %v482 = vld [vmem:[%s3] sm:$0xff]
    %v483 = vld [vmem:[%s3 + $0x8] sm:$0xff]
    %v484 = vld [vmem:[%s3 + $0x10] sm:$0xff]
    %v485 = vld [vmem:[%s3 + $0x18] sm:$0xff]
    %v486 = vld [vmem:[%s3 + $0x20] sm:$0xff]
    %v487 = vld [vmem:[%s3 + $0x28] sm:$0xff]
    %v488 = vld [vmem:[%s3 + $0x30] sm:$0xff]
    %v489 = vld [vmem:[%s3 + $0x38] sm:$0xff]
    %v490 = vld [vmem:[%s3 + $0x40] sm:$0xff]
    %v491 = vld [vmem:[%s3 + $0x48] sm:$0xff]
    %v492 = vld [vmem:[%s3 + $0x50] sm:$0xff]
    %v493 = vld [vmem:[%s3 + $0x58] sm:$0xff]
    %v494 = vld [vmem:[%s4] sm:$0x1]
    %v495 = vlaneseq
    %v496 = vshrl.u32 %v495, 7
    %v497 = vsub.s32 0, %v496
    %v498 = vrot.slane %v494, %v497
    %vm499 = vcmask 785408
    %v501 = vsel %vm499, %v466, 0
    %v504 = vsel %vm499, %v467, 0
    %v507 = vsel %vm499, %v468, 0
    %v510 = vsel %vm499, %v469, 0
    %v513 = vsel %vm499, %v470, 0
    %v516 = vsel %vm499, %v471, 0
    %v519 = vsel %vm499, %v472, 0
    %v522 = vsel %vm499, %v473, 0
    %v525 = vsel %vm499, %v474, 0
    %v528 = vsel %vm499, %v475, 0
    %v531 = vsel %vm499, %v476, 0
    %v534 = vsel %vm499, %v477, 0
    %v537 = vsel %vm499, %v478, 0
    %v540 = vsel %vm499, %v479, 0
    %v543 = vsel %vm499, %v480, 0
    %v546 = vsel %vm499, %v481, 0
    %548 = vmatprep.subr.mxu0 0.0
    %549 = vmatpush1.msra.mxu0 0.0
    %550 = vmatprep.subr.mxu0 0.0
    %551 = vmatpush1.msra.mxu0 0.0
    %552 = vmatprep.subr.mxu0 0.0
    %553 = vmatpush1.msra.mxu0 0.0
    %554 = vmatprep.subr.mxu0 0.0
    %555 = vmatpush1.msra.mxu0 0.0
    %556 = vmatprep.subr.mxu0 0.0
    %557 = vmatpush1.msra.mxu0 %v493
    %558 = vmatprep.subr.mxu0 0.0
    %559 = vmatpush1.msra.mxu0 %v492
    %560 = vmatprep.subr.mxu0 0.0
    %561 = vmatpush1.msra.mxu0 %v491
    %562 = vmatprep.subr.mxu0 0.0
    %563 = vmatpush1.msra.mxu0 %v490
    %564 = vmatprep.subr.mxu0 0.0
    %565 = vmatpush1.msra.mxu0 %v489
    %566 = vmatprep.subr.mxu0 0.0
    %567 = vmatpush1.msra.mxu0 %v488
    %568 = vmatprep.subr.mxu0 0.0
    %569 = vmatpush1.msra.mxu0 %v487
    %570 = vmatprep.subr.mxu0 0.0
    %571 = vmatpush1.msra.mxu0 %v486
    %572 = vmatprep.subr.mxu0 0.0
    %573 = vmatpush1.msra.mxu0 %v485
    %574 = vmatprep.subr.mxu0 0.0
    %575 = vmatpush1.msra.mxu0 %v484
    %576 = vmatprep.subr.mxu0 0.0
    %577 = vmatpush1.msra.mxu0 %v483
    %578 = vmatprep.subr.mxu0 0.0
    %579 = vmatpush1.msra.mxu0 %v482
    %580 = vmatprep.subr.mxu0 0.0
    %581 = vmatpush2.msra.mxu0 0.0
    %582 = vmatprep.subr.mxu0 0.0
    %583 = vmatpush2.msra.mxu0 0.0
    %584 = vmatprep.subr.mxu0 0.0
    %585 = vmatpush2.msra.mxu0 0.0
    %586 = vmatprep.subr.mxu0 0.0
    %587 = vmatpush2.msra.mxu0 0.0
    %588 = vmatprep.subr.mxu0 0.0
    %589 = vmatpush2.msra.mxu0 0.0
    %590 = vmatprep.subr.mxu0 0.0
    %591 = vmatpush2.msra.mxu0 0.0
    %592 = vmatprep.subr.mxu0 0.0
    %593 = vmatpush2.msra.mxu0 0.0
    %594 = vmatprep.subr.mxu0 0.0
    %595 = vmatpush2.msra.mxu0 0.0
    %596 = vmatprep.subr.mxu0 0.0
    %597 = vmatpush2.msra.mxu0 0.0
    %598 = vmatprep.subr.mxu0 0.0
    %599 = vmatpush2.msra.mxu0 0.0
    %600 = vmatprep.subr.mxu0 0.0
    %601 = vmatpush2.msra.mxu0 0.0
    %602 = vmatprep.subr.mxu0 0.0
    %603 = vmatpush2.msra.mxu0 0.0
    %604 = vmatprep.subr.mxu0 0.0
    %605 = vmatpush2.msra.mxu0 0.0
    %606 = vmatprep.subr.mxu0 0.0
    %607 = vmatpush2.msra.mxu0 0.0
    %608 = vmatprep.subr.mxu0 0.0
    %609 = vmatpush2.msra.mxu0 0.0
    %610 = vmatprep.subr.mxu0 0.0
    %611 = vmatpush2.msra.mxu0 0.0
    %612 = vmatprep.mubr.f32.mxu0 0.0
    %613 = vmatmul.mubr.f32.gmra.mxu0 %v501
    %v614 = vpop.f32.mrf.mxu0
    %v615 = vadd.f32 %v498, %v614
    %v616 = vpop.f32.mrf.mxu0
    %617 = vmatprep.mubr.f32.mxu0 0.0
    %618 = vmatmul.mubr.f32.gmra.mxu0 %v504
    %v619 = vpop.f32.mrf.mxu0
    %v620 = vadd.f32 %v498, %v619
    %v621 = vpop.f32.mrf.mxu0
    %622 = vmatprep.mubr.f32.mxu0 0.0
    %623 = vmatmul.mubr.f32.gmra.mxu0 %v507
    %v624 = vpop.f32.mrf.mxu0
    %v625 = vadd.f32 %v498, %v624
    %v626 = vpop.f32.mrf.mxu0
    %627 = vmatprep.mubr.f32.mxu0 0.0
    %628 = vmatmul.mubr.f32.gmra.mxu0 %v510
    %v629 = vpop.f32.mrf.mxu0
    %v630 = vadd.f32 %v498, %v629
    %v631 = vpop.f32.mrf.mxu0
    %632 = vmatprep.mubr.f32.mxu0 0.0
    %633 = vmatmul.mubr.f32.gmra.mxu0 %v513
    %v634 = vpop.f32.mrf.mxu0
    %v635 = vadd.f32 %v498, %v634
    %v636 = vpop.f32.mrf.mxu0
    %637 = vmatprep.mubr.f32.mxu0 0.0
    %638 = vmatmul.mubr.f32.gmra.mxu0 %v516
    %v639 = vpop.f32.mrf.mxu0
    %v640 = vadd.f32 %v498, %v639
    %v641 = vpop.f32.mrf.mxu0
    %642 = vmatprep.mubr.f32.mxu0 0.0
    %643 = vmatmul.mubr.f32.gmra.mxu0 %v519
    %v644 = vpop.f32.mrf.mxu0
    %v645 = vadd.f32 %v498, %v644
    %v646 = vpop.f32.mrf.mxu0
    %647 = vmatprep.mubr.f32.mxu0 0.0
    %648 = vmatmul.mubr.f32.gmra.mxu0 %v522
    %v649 = vpop.f32.mrf.mxu0
    %v650 = vadd.f32 %v498, %v649
    %v651 = vpop.f32.mrf.mxu0
    %652 = vmatprep.mubr.f32.mxu0 0.0
    %653 = vmatmul.mubr.f32.gmra.mxu0 %v525
    %v654 = vpop.f32.mrf.mxu0
    %v655 = vadd.f32 %v498, %v654
    %v656 = vpop.f32.mrf.mxu0
    %657 = vmatprep.mubr.f32.mxu0 0.0
    %658 = vmatmul.mubr.f32.gmra.mxu0 %v528
    %v659 = vpop.f32.mrf.mxu0
    %v660 = vadd.f32 %v498, %v659
    %v661 = vpop.f32.mrf.mxu0
    %662 = vmatprep.mubr.f32.mxu0 0.0
    %663 = vmatmul.mubr.f32.gmra.mxu0 %v531
    %v664 = vpop.f32.mrf.mxu0
    %v665 = vadd.f32 %v498, %v664
    %v666 = vpop.f32.mrf.mxu0
    %667 = vmatprep.mubr.f32.mxu0 0.0
    %668 = vmatmul.mubr.f32.gmra.mxu0 %v534
    %v669 = vpop.f32.mrf.mxu0
    %v670 = vadd.f32 %v498, %v669
    %v671 = vpop.f32.mrf.mxu0
    %672 = vmatprep.mubr.f32.mxu0 0.0
    %673 = vmatmul.mubr.f32.gmra.mxu0 %v537
    %v674 = vpop.f32.mrf.mxu0
    %v675 = vadd.f32 %v498, %v674
    %v676 = vpop.f32.mrf.mxu0
    %677 = vmatprep.mubr.f32.mxu0 0.0
    %678 = vmatmul.mubr.f32.gmra.mxu0 %v540
    %v679 = vpop.f32.mrf.mxu0
    %v680 = vadd.f32 %v498, %v679
    %v681 = vpop.f32.mrf.mxu0
    %682 = vmatprep.mubr.f32.mxu0 0.0
    %683 = vmatmul.mubr.f32.gmra.mxu0 %v543
    %v684 = vpop.f32.mrf.mxu0
    %v685 = vadd.f32 %v498, %v684
    %v686 = vpop.f32.mrf.mxu0
    %687 = vmatprep.mubr.f32.mxu0 0.0
    %688 = vmatmul.mubr.f32.gmra.mxu0 %v546
    %v689 = vpop.f32.mrf.mxu0
    %v690 = vadd.f32 %v498, %v689
    %v691 = vpop.f32.mrf.mxu0
    %692 = vdwg.mxu0
    %v693 = vmax.f32 %v615, 0.0
    %v694 = vmax.f32 %v620, 0.0
    %v695 = vmax.f32 %v625, 0.0
    %v696 = vmax.f32 %v630, 0.0
    %v697 = vmax.f32 %v635, 0.0
    %v698 = vmax.f32 %v640, 0.0
    %v699 = vmax.f32 %v645, 0.0
    %v700 = vmax.f32 %v650, 0.0
    %v701 = vmax.f32 %v655, 0.0
    %v702 = vmax.f32 %v660, 0.0
    %v703 = vmax.f32 %v665, 0.0
    %v704 = vmax.f32 %v670, 0.0
    %v705 = vmax.f32 %v675, 0.0
    %v706 = vmax.f32 %v680, 0.0
    %v707 = vmax.f32 %v685, 0.0
    %v708 = vmax.f32 %v690, 0.0
    %v709 = vld [vmem:[%s5] sm:$0xff]
    %v710 = vld [vmem:[%s5 + $0x8] sm:$0xff]
    %v711 = vld [vmem:[%s5 + $0x10] sm:$0xff]
    %v712 = vld [vmem:[%s5 + $0x18] sm:$0xff]
    %v713 = vld [vmem:[%s6] sm:$0x1]
    %v714 = vlaneseq
    %v715 = vshrl.u32 %v714, 7
    %v716 = vsub.s32 0, %v715
    %v717 = vrot.slane %v713, %v716
    %v719 = vsel %vm252, %v693, 0
    %v722 = vsel %vm252, %v694, 0
    %v725 = vsel %vm252, %v695, 0
    %v728 = vsel %vm252, %v696, 0
    %v731 = vsel %vm252, %v697, 0
    %v734 = vsel %vm252, %v698, 0
    %v737 = vsel %vm252, %v699, 0
    %v740 = vsel %vm252, %v700, 0
    %v743 = vsel %vm252, %v701, 0
    %v746 = vsel %vm252, %v702, 0
    %v749 = vsel %vm252, %v703, 0
    %v752 = vsel %vm252, %v704, 0
    %v755 = vsel %vm252, %v705, 0
    %v758 = vsel %vm252, %v706, 0
    %v761 = vsel %vm252, %v707, 0
    %v764 = vsel %vm252, %v708, 0
    %766 = vmatprep.subr.mxu0 0.0
    %767 = vmatpush1.msra.mxu0 0.0
    %768 = vmatprep.subr.mxu0 0.0
    %769 = vmatpush1.msra.mxu0 0.0
    %770 = vmatprep.subr.mxu0 0.0
    %771 = vmatpush1.msra.mxu0 0.0
    %772 = vmatprep.subr.mxu0 0.0
    %773 = vmatpush1.msra.mxu0 0.0
    %774 = vmatprep.subr.mxu0 0.0
    %775 = vmatpush1.msra.mxu0 0.0
    %776 = vmatprep.subr.mxu0 0.0
    %777 = vmatpush1.msra.mxu0 0.0
    %778 = vmatprep.subr.mxu0 0.0
    %779 = vmatpush1.msra.mxu0 0.0
    %780 = vmatprep.subr.mxu0 0.0
    %781 = vmatpush1.msra.mxu0 0.0
    %782 = vmatprep.subr.mxu0 0.0
    %783 = vmatpush1.msra.mxu0 0.0
    %784 = vmatprep.subr.mxu0 0.0
    %785 = vmatpush1.msra.mxu0 0.0
    %786 = vmatprep.subr.mxu0 0.0
    %787 = vmatpush1.msra.mxu0 0.0
    %788 = vmatprep.subr.mxu0 0.0
    %789 = vmatpush1.msra.mxu0 0.0
    %790 = vmatprep.subr.mxu0 0.0
    %791 = vmatpush1.msra.mxu0 %v712
    %792 = vmatprep.subr.mxu0 0.0
    %793 = vmatpush1.msra.mxu0 %v711
    %794 = vmatprep.subr.mxu0 0.0
    %795 = vmatpush1.msra.mxu0 %v710
    %796 = vmatprep.subr.mxu0 0.0
    %797 = vmatpush1.msra.mxu0 %v709
    %798 = vmatprep.subr.mxu0 0.0
    %799 = vmatpush2.msra.mxu0 0.0
    %800 = vmatprep.subr.mxu0 0.0
    %801 = vmatpush2.msra.mxu0 0.0
    %802 = vmatprep.subr.mxu0 0.0
    %803 = vmatpush2.msra.mxu0 0.0
    %804 = vmatprep.subr.mxu0 0.0
    %805 = vmatpush2.msra.mxu0 0.0
    %806 = vmatprep.subr.mxu0 0.0
    %807 = vmatpush2.msra.mxu0 0.0
    %808 = vmatprep.subr.mxu0 0.0
    %809 = vmatpush2.msra.mxu0 0.0
    %810 = vmatprep.subr.mxu0 0.0
    %811 = vmatpush2.msra.mxu0 0.0
    %812 = vmatprep.subr.mxu0 0.0
    %813 = vmatpush2.msra.mxu0 0.0
    %814 = vmatprep.subr.mxu0 0.0
    %815 = vmatpush2.msra.mxu0 0.0
    %816 = vmatprep.subr.mxu0 0.0
    %817 = vmatpush2.msra.mxu0 0.0
    %818 = vmatprep.subr.mxu0 0.0
    %819 = vmatpush2.msra.mxu0 0.0
    %820 = vmatprep.subr.mxu0 0.0
    %821 = vmatpush2.msra.mxu0 0.0
    %822 = vmatprep.subr.mxu0 0.0
    %823 = vmatpush2.msra.mxu0 0.0
    %824 = vmatprep.subr.mxu0 0.0
    %825 = vmatpush2.msra.mxu0 0.0
    %826 = vmatprep.subr.mxu0 0.0
    %827 = vmatpush2.msra.mxu0 0.0
    %828 = vmatprep.subr.mxu0 0.0
    %829 = vmatpush2.msra.mxu0 0.0
    %830 = vmatprep.mubr.f32.mxu0 0.0
    %831 = vmatmul.mubr.f32.gmra.mxu0 %v719
    %v832 = vpop.f32.mrf.mxu0
    %v833 = vadd.f32 %v717, %v832
    %v834 = vpop.f32.mrf.mxu0
    %835 = vmatprep.mubr.f32.mxu0 0.0
    %836 = vmatmul.mubr.f32.gmra.mxu0 %v722
    %v837 = vpop.f32.mrf.mxu0
    %v838 = vadd.f32 %v717, %v837
    %v839 = vpop.f32.mrf.mxu0
    %840 = vmatprep.mubr.f32.mxu0 0.0
    %841 = vmatmul.mubr.f32.gmra.mxu0 %v725
    %v842 = vpop.f32.mrf.mxu0
    %v843 = vadd.f32 %v717, %v842
    %v844 = vpop.f32.mrf.mxu0
    %845 = vmatprep.mubr.f32.mxu0 0.0
    %846 = vmatmul.mubr.f32.gmra.mxu0 %v728
    %v847 = vpop.f32.mrf.mxu0
    %v848 = vadd.f32 %v717, %v847
    %v849 = vpop.f32.mrf.mxu0
    %850 = vmatprep.mubr.f32.mxu0 0.0
    %851 = vmatmul.mubr.f32.gmra.mxu0 %v731
    %v852 = vpop.f32.mrf.mxu0
    %v853 = vadd.f32 %v717, %v852
    %v854 = vpop.f32.mrf.mxu0
    %855 = vmatprep.mubr.f32.mxu0 0.0
    %856 = vmatmul.mubr.f32.gmra.mxu0 %v734
    %v857 = vpop.f32.mrf.mxu0
    %v858 = vadd.f32 %v717, %v857
    %v859 = vpop.f32.mrf.mxu0
    %860 = vmatprep.mubr.f32.mxu0 0.0
    %861 = vmatmul.mubr.f32.gmra.mxu0 %v737
    %v862 = vpop.f32.mrf.mxu0
    %v863 = vadd.f32 %v717, %v862
    %v864 = vpop.f32.mrf.mxu0
    %865 = vmatprep.mubr.f32.mxu0 0.0
    %866 = vmatmul.mubr.f32.gmra.mxu0 %v740
    %v867 = vpop.f32.mrf.mxu0
    %v868 = vadd.f32 %v717, %v867
    %v869 = vpop.f32.mrf.mxu0
    %870 = vmatprep.mubr.f32.mxu0 0.0
    %871 = vmatmul.mubr.f32.gmra.mxu0 %v743
    %v872 = vpop.f32.mrf.mxu0
    %v873 = vadd.f32 %v717, %v872
    %v874 = vpop.f32.mrf.mxu0
    %875 = vmatprep.mubr.f32.mxu0 0.0
    %876 = vmatmul.mubr.f32.gmra.mxu0 %v746
    %v877 = vpop.f32.mrf.mxu0
    %v878 = vadd.f32 %v717, %v877
    %v879 = vpop.f32.mrf.mxu0
    %880 = vmatprep.mubr.f32.mxu0 0.0
    %881 = vmatmul.mubr.f32.gmra.mxu0 %v749
    %v882 = vpop.f32.mrf.mxu0
    %v883 = vadd.f32 %v717, %v882
    %v884 = vpop.f32.mrf.mxu0
    %885 = vmatprep.mubr.f32.mxu0 0.0
    %886 = vmatmul.mubr.f32.gmra.mxu0 %v752
    %v887 = vpop.f32.mrf.mxu0
    %v888 = vadd.f32 %v717, %v887
    %v889 = vpop.f32.mrf.mxu0
    %890 = vmatprep.mubr.f32.mxu0 0.0
    %891 = vmatmul.mubr.f32.gmra.mxu0 %v755
    %v892 = vpop.f32.mrf.mxu0
    %v893 = vadd.f32 %v717, %v892
    %v894 = vpop.f32.mrf.mxu0
    %895 = vmatprep.mubr.f32.mxu0 0.0
    %896 = vmatmul.mubr.f32.gmra.mxu0 %v758
    %v897 = vpop.f32.mrf.mxu0
    %v898 = vadd.f32 %v717, %v897
    %v899 = vpop.f32.mrf.mxu0
    %900 = vmatprep.mubr.f32.mxu0 0.0
    %901 = vmatmul.mubr.f32.gmra.mxu0 %v761
    %v902 = vpop.f32.mrf.mxu0
    %v903 = vadd.f32 %v717, %v902
    %v904 = vpop.f32.mrf.mxu0
    %905 = vmatprep.mubr.f32.mxu0 0.0
    %906 = vmatmul.mubr.f32.gmra.mxu0 %v764
    %v907 = vpop.f32.mrf.mxu0
    %v908 = vadd.f32 %v717, %v907
    %v909 = vpop.f32.mrf.mxu0
    %910 = vdwg.mxu0
    %v911 = vadd.f32 %v174, %v833
    %v912 = vadd.f32 %v179, %v838
    %v913 = vadd.f32 %v184, %v843
    %v914 = vadd.f32 %v189, %v848
    %v915 = vadd.f32 %v194, %v853
    %v916 = vadd.f32 %v199, %v858
    %v917 = vadd.f32 %v204, %v863
    %v918 = vadd.f32 %v209, %v868
    %v919 = vadd.f32 %v214, %v873
    %v920 = vadd.f32 %v219, %v878
    %v921 = vadd.f32 %v224, %v883
    %v922 = vadd.f32 %v229, %v888
    %v923 = vadd.f32 %v234, %v893
    %v924 = vadd.f32 %v239, %v898
    %v925 = vadd.f32 %v244, %v903
    %v926 = vadd.f32 %v249, %v908
    %927 = vst.msk [vmem:[#allocation2 + $0x8] sm:$0xff] %vm252, %v911
    %928 = vst.msk [vmem:[#allocation2 + $0x10] sm:$0xff] %vm252, %v912
    %929 = vst.msk [vmem:[#allocation2 + $0x18] sm:$0xff] %vm252, %v913
    %930 = vst.msk [vmem:[#allocation2 + $0x20] sm:$0xff] %vm252, %v914
    %931 = vst.msk [vmem:[#allocation2 + $0x28] sm:$0xff] %vm252, %v915
    %932 = vst.msk [vmem:[#allocation2 + $0x30] sm:$0xff] %vm252, %v916
    %933 = vst.msk [vmem:[#allocation2 + $0x38] sm:$0xff] %vm252, %v917
    %934 = vst.msk [vmem:[#allocation2 + $0x40] sm:$0xff] %vm252, %v918
    %935 = vst.msk [vmem:[#allocation2 + $0x58] sm:$0xff] %vm252, %v919
    %936 = vst.msk [vmem:[#allocation2 + $0x60] sm:$0xff] %vm252, %v920
    %937 = vst.msk [vmem:[#allocation2 + $0x68] sm:$0xff] %vm252, %v921
    %938 = vst.msk [vmem:[#allocation2 + $0x70] sm:$0xff] %vm252, %v922
    %939 = vst.msk [vmem:[#allocation2 + $0x78] sm:$0xff] %vm252, %v923
    %940 = vst.msk [vmem:[#allocation2 + $0x80] sm:$0xff] %vm252, %v924
    %941 = vst.msk [vmem:[#allocation2 + $0x88] sm:$0xff] %vm252, %v925
    %942 = vst.msk [vmem:[#allocation2 + $0x90] sm:$0xff] %vm252, %v926
    %v943 = vld [vmem:[#allocation2 + $0x6] sm:$0xff]
    %v944 = vld [vmem:[#allocation2 + $0xe] sm:$0xff]
    %v945 = vld [vmem:[#allocation2 + $0x16] sm:$0xff]
    %v946 = vld [vmem:[#allocation2 + $0x1e] sm:$0xff]
    %v947 = vld [vmem:[#allocation2 + $0x26] sm:$0xff]
    %v948 = vld [vmem:[#allocation2 + $0x2e] sm:$0xff]
    %v949 = vld [vmem:[#allocation2 + $0x36] sm:$0xff]
    %v950 = vld [vmem:[#allocation2 + $0x3e] sm:$0xff]
    %v951 = vld [vmem:[#allocation2 + $0x56] sm:$0xff]
    %v952 = vld [vmem:[#allocation2 + $0x5e] sm:$0xff]
    %v953 = vld [vmem:[#allocation2 + $0x66] sm:$0xff]
    %v954 = vld [vmem:[#allocation2 + $0x6e] sm:$0xff]
    %v955 = vld [vmem:[#allocation2 + $0x76] sm:$0xff]
    %v956 = vld [vmem:[#allocation2 + $0x7e] sm:$0xff]
    %v957 = vld [vmem:[#allocation2 + $0x86] sm:$0xff]
    %v958 = vld [vmem:[#allocation2 + $0x8e] sm:$0xff]
    %v959 = vld [vmem:[#allocation2 + $0xa] sm:$0xff]
    %v960 = vld [vmem:[#allocation2 + $0x12] sm:$0xff]
    %v961 = vld [vmem:[#allocation2 + $0x1a] sm:$0xff]
    %v962 = vld [vmem:[#allocation2 + $0x22] sm:$0xff]
    %v963 = vld [vmem:[#allocation2 + $0x2a] sm:$0xff]
    %v964 = vld [vmem:[#allocation2 + $0x32] sm:$0xff]
    %v965 = vld [vmem:[#allocation2 + $0x3a] sm:$0xff]
    %v966 = vld [vmem:[#allocation2 + $0x42] sm:$0xff]
    %v967 = vld [vmem:[#allocation2 + $0x5a] sm:$0xff]
    %v968 = vld [vmem:[#allocation2 + $0x62] sm:$0xff]
    %v969 = vld [vmem:[#allocation2 + $0x6a] sm:$0xff]
    %v970 = vld [vmem:[#allocation2 + $0x72] sm:$0xff]
    %v971 = vld [vmem:[#allocation2 + $0x7a] sm:$0xff]
    %v972 = vld [vmem:[#allocation2 + $0x82] sm:$0xff]
    %v973 = vld [vmem:[#allocation2 + $0x8a] sm:$0xff]
    %v974 = vld [vmem:[#allocation2 + $0x92] sm:$0xff]
    %991 = vrot.lane.b32.xlu0 %v911, 32
    %v992 = vpop.permute.xlu0 %991
    %993 = vrot.lane.b32.xlu0 %v912, 32
    %v994 = vpop.permute.xlu0 %993
    %995 = vrot.lane.b32.xlu0 %v913, 32
    %v996 = vpop.permute.xlu0 %995
    %997 = vrot.lane.b32.xlu0 %v914, 32
    %v998 = vpop.permute.xlu0 %997
    %999 = vrot.lane.b32.xlu0 %v915, 32
    %v1000 = vpop.permute.xlu0 %999
    %1001 = vrot.lane.b32.xlu0 %v916, 32
    %v1002 = vpop.permute.xlu0 %1001
    %1003 = vrot.lane.b32.xlu0 %v917, 32
    %v1004 = vpop.permute.xlu0 %1003
    %1005 = vrot.lane.b32.xlu0 %v918, 32
    %v1006 = vpop.permute.xlu0 %1005
    %1007 = vrot.lane.b32.xlu0 %v919, 32
    %v1008 = vpop.permute.xlu0 %1007
    %1009 = vrot.lane.b32.xlu0 %v920, 32
    %v1010 = vpop.permute.xlu0 %1009
    %1011 = vrot.lane.b32.xlu0 %v921, 32
    %v1012 = vpop.permute.xlu0 %1011
    %1013 = vrot.lane.b32.xlu0 %v922, 32
    %v1014 = vpop.permute.xlu0 %1013
    %1015 = vrot.lane.b32.xlu0 %v923, 32
    %v1016 = vpop.permute.xlu0 %1015
    %1017 = vrot.lane.b32.xlu0 %v924, 32
    %v1018 = vpop.permute.xlu0 %1017
    %1019 = vrot.lane.b32.xlu0 %v925, 32
    %v1020 = vpop.permute.xlu0 %1019
    %1021 = vrot.lane.b32.xlu0 %v926, 32
    %v1022 = vpop.permute.xlu0 %1021
    %1055 = vrot.lane.b32.xlu0 %v959, 64
    %v1056 = vpop.permute.xlu0 %1055
    %1057 = vrot.lane.b32.xlu0 %v960, 64
    %v1058 = vpop.permute.xlu0 %1057
    %1059 = vrot.lane.b32.xlu0 %v961, 64
    %v1060 = vpop.permute.xlu0 %1059
    %1061 = vrot.lane.b32.xlu0 %v962, 64
    %v1062 = vpop.permute.xlu0 %1061
    %1063 = vrot.lane.b32.xlu0 %v963, 64
    %v1064 = vpop.permute.xlu0 %1063
    %1065 = vrot.lane.b32.xlu0 %v964, 64
    %v1066 = vpop.permute.xlu0 %1065
    %1067 = vrot.lane.b32.xlu0 %v965, 64
    %v1068 = vpop.permute.xlu0 %1067
    %1069 = vrot.lane.b32.xlu0 %v966, 64
    %v1070 = vpop.permute.xlu0 %1069
    %1071 = vrot.lane.b32.xlu0 %v967, 64
    %v1072 = vpop.permute.xlu0 %1071
    %1073 = vrot.lane.b32.xlu0 %v968, 64
    %v1074 = vpop.permute.xlu0 %1073
    %1075 = vrot.lane.b32.xlu0 %v969, 64
    %v1076 = vpop.permute.xlu0 %1075
    %1077 = vrot.lane.b32.xlu0 %v970, 64
    %v1078 = vpop.permute.xlu0 %1077
    %1079 = vrot.lane.b32.xlu0 %v971, 64
    %v1080 = vpop.permute.xlu0 %1079
    %1081 = vrot.lane.b32.xlu0 %v972, 64
    %v1082 = vpop.permute.xlu0 %1081
    %1083 = vrot.lane.b32.xlu0 %v973, 64
    %v1084 = vpop.permute.xlu0 %1083
    %1085 = vrot.lane.b32.xlu0 %v974, 64
    %v1086 = vpop.permute.xlu0 %1085
    %v1103 = vsel %vm252, %v943, %v992
    %v1104 = vsel %vm252, %v944, %v994
    %v1105 = vsel %vm252, %v945, %v996
    %v1106 = vsel %vm252, %v946, %v998
    %v1107 = vsel %vm252, %v947, %v1000
    %v1108 = vsel %vm252, %v948, %v1002
    %v1109 = vsel %vm252, %v949, %v1004
    %v1110 = vsel %vm252, %v950, %v1006
    %v1111 = vsel %vm252, %v951, %v1008
    %v1112 = vsel %vm252, %v952, %v1010
    %v1113 = vsel %vm252, %v953, %v1012
    %v1114 = vsel %vm252, %v954, %v1014
    %v1115 = vsel %vm252, %v955, %v1016
    %v1116 = vsel %vm252, %v956, %v1018
    %v1117 = vsel %vm252, %v957, %v1020
    %v1118 = vsel %vm252, %v958, %v1022
    %v1119 = vsel %vm465, %v1103, %v1056
    %v1120 = vsel %vm465, %v1104, %v1058
    %v1121 = vsel %vm465, %v1105, %v1060
    %v1122 = vsel %vm465, %v1106, %v1062
    %v1123 = vsel %vm465, %v1107, %v1064
    %v1124 = vsel %vm465, %v1108, %v1066
    %v1125 = vsel %vm465, %v1109, %v1068
    %v1126 = vsel %vm465, %v1110, %v1070
    %v1127 = vsel %vm465, %v1111, %v1072
    %v1128 = vsel %vm465, %v1112, %v1074
    %v1129 = vsel %vm465, %v1113, %v1076
    %v1130 = vsel %vm465, %v1114, %v1078
    %v1131 = vsel %vm465, %v1115, %v1080
    %v1132 = vsel %vm465, %v1116, %v1082
    %v1133 = vsel %vm465, %v1117, %v1084
    %v1134 = vsel %vm465, %v1118, %v1086
    %s1135 = scalar_lea.vmem %s3, 96
    %v1136 = vld [vmem:[%s1135] sm:$0xff]
    %v1137 = vld [vmem:[%s1135 + $0x8] sm:$0xff]
    %v1138 = vld [vmem:[%s1135 + $0x10] sm:$0xff]
    %v1139 = vld [vmem:[%s1135 + $0x18] sm:$0xff]
    %v1140 = vld [vmem:[%s1135 + $0x20] sm:$0xff]
    %v1141 = vld [vmem:[%s1135 + $0x28] sm:$0xff]
    %v1142 = vld [vmem:[%s1135 + $0x30] sm:$0xff]
    %v1143 = vld [vmem:[%s1135 + $0x38] sm:$0xff]
    %v1144 = vld [vmem:[%s1135 + $0x40] sm:$0xff]
    %v1145 = vld [vmem:[%s1135 + $0x48] sm:$0xff]
    %v1146 = vld [vmem:[%s1135 + $0x50] sm:$0xff]
    %v1147 = vld [vmem:[%s1135 + $0x58] sm:$0xff]
    %v1148 = vld [vmem:[%s4 + $0x1] sm:$0x1]
    %v1149 = vlaneseq
    %v1150 = vshrl.u32 %v1149, 7
    %v1151 = vsub.s32 0, %v1150
    %v1152 = vrot.slane %v1148, %v1151
    %v1154 = vsel %vm499, %v1119, 0
    %v1157 = vsel %vm499, %v1120, 0
    %v1160 = vsel %vm499, %v1121, 0
    %v1163 = vsel %vm499, %v1122, 0
    %v1166 = vsel %vm499, %v1123, 0
    %v1169 = vsel %vm499, %v1124, 0
    %v1172 = vsel %vm499, %v1125, 0
    %v1175 = vsel %vm499, %v1126, 0
    %v1178 = vsel %vm499, %v1127, 0
    %v1181 = vsel %vm499, %v1128, 0
    %v1184 = vsel %vm499, %v1129, 0
    %v1187 = vsel %vm499, %v1130, 0
    %v1190 = vsel %vm499, %v1131, 0
    %v1193 = vsel %vm499, %v1132, 0
    %v1196 = vsel %vm499, %v1133, 0
    %v1199 = vsel %vm499, %v1134, 0
    %1201 = vmatprep.subr.mxu0 0.0
    %1202 = vmatpush1.msra.mxu0 0.0
    %1203 = vmatprep.subr.mxu0 0.0
    %1204 = vmatpush1.msra.mxu0 0.0
    %1205 = vmatprep.subr.mxu0 0.0
    %1206 = vmatpush1.msra.mxu0 0.0
    %1207 = vmatprep.subr.mxu0 0.0
    %1208 = vmatpush1.msra.mxu0 0.0
    %1209 = vmatprep.subr.mxu0 0.0
    %1210 = vmatpush1.msra.mxu0 %v1147
    %1211 = vmatprep.subr.mxu0 0.0
    %1212 = vmatpush1.msra.mxu0 %v1146
    %1213 = vmatprep.subr.mxu0 0.0
    %1214 = vmatpush1.msra.mxu0 %v1145
    %1215 = vmatprep.subr.mxu0 0.0
    %1216 = vmatpush1.msra.mxu0 %v1144
    %1217 = vmatprep.subr.mxu0 0.0
    %1218 = vmatpush1.msra.mxu0 %v1143
    %1219 = vmatprep.subr.mxu0 0.0
    %1220 = vmatpush1.msra.mxu0 %v1142
    %1221 = vmatprep.subr.mxu0 0.0
    %1222 = vmatpush1.msra.mxu0 %v1141
    %1223 = vmatprep.subr.mxu0 0.0
    %1224 = vmatpush1.msra.mxu0 %v1140
    %1225 = vmatprep.subr.mxu0 0.0
    %1226 = vmatpush1.msra.mxu0 %v1139
    %1227 = vmatprep.subr.mxu0 0.0
    %1228 = vmatpush1.msra.mxu0 %v1138
    %1229 = vmatprep.subr.mxu0 0.0
    %1230 = vmatpush1.msra.mxu0 %v1137
    %1231 = vmatprep.subr.mxu0 0.0
    %1232 = vmatpush1.msra.mxu0 %v1136
    %1233 = vmatprep.subr.mxu0 0.0
    %1234 = vmatpush2.msra.mxu0 0.0
    %1235 = vmatprep.subr.mxu0 0.0
    %1236 = vmatpush2.msra.mxu0 0.0
    %1237 = vmatprep.subr.mxu0 0.0
    %1238 = vmatpush2.msra.mxu0 0.0
    %1239 = vmatprep.subr.mxu0 0.0
    %1240 = vmatpush2.msra.mxu0 0.0
    %1241 = vmatprep.subr.mxu0 0.0
    %1242 = vmatpush2.msra.mxu0 0.0
    %1243 = vmatprep.subr.mxu0 0.0
    %1244 = vmatpush2.msra.mxu0 0.0
    %1245 = vmatprep.subr.mxu0 0.0
    %1246 = vmatpush2.msra.mxu0 0.0
    %1247 = vmatprep.subr.mxu0 0.0
    %1248 = vmatpush2.msra.mxu0 0.0
    %1249 = vmatprep.subr.mxu0 0.0
    %1250 = vmatpush2.msra.mxu0 0.0
    %1251 = vmatprep.subr.mxu0 0.0
    %1252 = vmatpush2.msra.mxu0 0.0
    %1253 = vmatprep.subr.mxu0 0.0
    %1254 = vmatpush2.msra.mxu0 0.0
    %1255 = vmatprep.subr.mxu0 0.0
    %1256 = vmatpush2.msra.mxu0 0.0
    %1257 = vmatprep.subr.mxu0 0.0
    %1258 = vmatpush2.msra.mxu0 0.0
    %1259 = vmatprep.subr.mxu0 0.0
    %1260 = vmatpush2.msra.mxu0 0.0
    %1261 = vmatprep.subr.mxu0 0.0
    %1262 = vmatpush2.msra.mxu0 0.0
    %1263 = vmatprep.subr.mxu0 0.0
    %1264 = vmatpush2.msra.mxu0 0.0
    %1265 = vmatprep.mubr.f32.mxu0 0.0
    %1266 = vmatmul.mubr.f32.gmra.mxu0 %v1154
    %v1267 = vpop.f32.mrf.mxu0
    %v1268 = vadd.f32 %v1152, %v1267
    %v1269 = vpop.f32.mrf.mxu0
    %1270 = vmatprep.mubr.f32.mxu0 0.0
    %1271 = vmatmul.mubr.f32.gmra.mxu0 %v1157
    %v1272 = vpop.f32.mrf.mxu0
    %v1273 = vadd.f32 %v1152, %v1272
    %v1274 = vpop.f32.mrf.mxu0
    %1275 = vmatprep.mubr.f32.mxu0 0.0
    %1276 = vmatmul.mubr.f32.gmra.mxu0 %v1160
    %v1277 = vpop.f32.mrf.mxu0
    %v1278 = vadd.f32 %v1152, %v1277
    %v1279 = vpop.f32.mrf.mxu0
    %1280 = vmatprep.mubr.f32.mxu0 0.0
    %1281 = vmatmul.mubr.f32.gmra.mxu0 %v1163
    %v1282 = vpop.f32.mrf.mxu0
    %v1283 = vadd.f32 %v1152, %v1282
    %v1284 = vpop.f32.mrf.mxu0
    %1285 = vmatprep.mubr.f32.mxu0 0.0
    %1286 = vmatmul.mubr.f32.gmra.mxu0 %v1166
    %v1287 = vpop.f32.mrf.mxu0
    %v1288 = vadd.f32 %v1152, %v1287
    %v1289 = vpop.f32.mrf.mxu0
    %1290 = vmatprep.mubr.f32.mxu0 0.0
    %1291 = vmatmul.mubr.f32.gmra.mxu0 %v1169
    %v1292 = vpop.f32.mrf.mxu0
    %v1293 = vadd.f32 %v1152, %v1292
    %v1294 = vpop.f32.mrf.mxu0
    %1295 = vmatprep.mubr.f32.mxu0 0.0
    %1296 = vmatmul.mubr.f32.gmra.mxu0 %v1172
    %v1297 = vpop.f32.mrf.mxu0
    %v1298 = vadd.f32 %v1152, %v1297
    %v1299 = vpop.f32.mrf.mxu0
    %1300 = vmatprep.mubr.f32.mxu0 0.0
    %1301 = vmatmul.mubr.f32.gmra.mxu0 %v1175
    %v1302 = vpop.f32.mrf.mxu0
    %v1303 = vadd.f32 %v1152, %v1302
    %v1304 = vpop.f32.mrf.mxu0
    %1305 = vmatprep.mubr.f32.mxu0 0.0
    %1306 = vmatmul.mubr.f32.gmra.mxu0 %v1178
    %v1307 = vpop.f32.mrf.mxu0
    %v1308 = vadd.f32 %v1152, %v1307
    %v1309 = vpop.f32.mrf.mxu0
    %1310 = vmatprep.mubr.f32.mxu0 0.0
    %1311 = vmatmul.mubr.f32.gmra.mxu0 %v1181
    %v1312 = vpop.f32.mrf.mxu0
    %v1313 = vadd.f32 %v1152, %v1312
    %v1314 = vpop.f32.mrf.mxu0
    %1315 = vmatprep.mubr.f32.mxu0 0.0
    %1316 = vmatmul.mubr.f32.gmra.mxu0 %v1184
    %v1317 = vpop.f32.mrf.mxu0
    %v1318 = vadd.f32 %v1152, %v1317
    %v1319 = vpop.f32.mrf.mxu0
    %1320 = vmatprep.mubr.f32.mxu0 0.0
    %1321 = vmatmul.mubr.f32.gmra.mxu0 %v1187
    %v1322 = vpop.f32.mrf.mxu0
    %v1323 = vadd.f32 %v1152, %v1322
    %v1324 = vpop.f32.mrf.mxu0
    %1325 = vmatprep.mubr.f32.mxu0 0.0
    %1326 = vmatmul.mubr.f32.gmra.mxu0 %v1190
    %v1327 = vpop.f32.mrf.mxu0
    %v1328 = vadd.f32 %v1152, %v1327
    %v1329 = vpop.f32.mrf.mxu0
    %1330 = vmatprep.mubr.f32.mxu0 0.0
    %1331 = vmatmul.mubr.f32.gmra.mxu0 %v1193
    %v1332 = vpop.f32.mrf.mxu0
    %v1333 = vadd.f32 %v1152, %v1332
    %v1334 = vpop.f32.mrf.mxu0
    %1335 = vmatprep.mubr.f32.mxu0 0.0
    %1336 = vmatmul.mubr.f32.gmra.mxu0 %v1196
    %v1337 = vpop.f32.mrf.mxu0
    %v1338 = vadd.f32 %v1152, %v1337
    %v1339 = vpop.f32.mrf.mxu0
    %1340 = vmatprep.mubr.f32.mxu0 0.0
    %1341 = vmatmul.mubr.f32.gmra.mxu0 %v1199
    %v1342 = vpop.f32.mrf.mxu0
    %v1343 = vadd.f32 %v1152, %v1342
    %v1344 = vpop.f32.mrf.mxu0
    %1345 = vdwg.mxu0
    %v1346 = vmax.f32 %v1268, 0.0
    %v1347 = vmax.f32 %v1273, 0.0
    %v1348 = vmax.f32 %v1278, 0.0
    %v1349 = vmax.f32 %v1283, 0.0
    %v1350 = vmax.f32 %v1288, 0.0
    %v1351 = vmax.f32 %v1293, 0.0
    %v1352 = vmax.f32 %v1298, 0.0
    %v1353 = vmax.f32 %v1303, 0.0
    %v1354 = vmax.f32 %v1308, 0.0
    %v1355 = vmax.f32 %v1313, 0.0
    %v1356 = vmax.f32 %v1318, 0.0
    %v1357 = vmax.f32 %v1323, 0.0
    %v1358 = vmax.f32 %v1328, 0.0
    %v1359 = vmax.f32 %v1333, 0.0
    %v1360 = vmax.f32 %v1338, 0.0
    %v1361 = vmax.f32 %v1343, 0.0
    %s1362 = scalar_lea.vmem %s5, 32
    %v1363 = vld [vmem:[%s1362] sm:$0xff]
    %v1364 = vld [vmem:[%s1362 + $0x8] sm:$0xff]
    %v1365 = vld [vmem:[%s1362 + $0x10] sm:$0xff]
    %v1366 = vld [vmem:[%s1362 + $0x18] sm:$0xff]
    %v1367 = vld [vmem:[%s6 + $0x1] sm:$0x1]
    %v1368 = vlaneseq
    %v1369 = vshrl.u32 %v1368, 7
    %v1370 = vsub.s32 0, %v1369
    %v1371 = vrot.slane %v1367, %v1370
    %v1373 = vsel %vm252, %v1346, 0
    %v1376 = vsel %vm252, %v1347, 0
    %v1379 = vsel %vm252, %v1348, 0
    %v1382 = vsel %vm252, %v1349, 0
    %v1385 = vsel %vm252, %v1350, 0
    %v1388 = vsel %vm252, %v1351, 0
    %v1391 = vsel %vm252, %v1352, 0
    %v1394 = vsel %vm252, %v1353, 0
    %v1397 = vsel %vm252, %v1354, 0
    %v1400 = vsel %vm252, %v1355, 0
    %v1403 = vsel %vm252, %v1356, 0
    %v1406 = vsel %vm252, %v1357, 0
    %v1409 = vsel %vm252, %v1358, 0
    %v1412 = vsel %vm252, %v1359, 0
    %v1415 = vsel %vm252, %v1360, 0
    %v1418 = vsel %vm252, %v1361, 0
    %1420 = vmatprep.subr.mxu0 0.0
    %1421 = vmatpush1.msra.mxu0 0.0
    %1422 = vmatprep.subr.mxu0 0.0
    %1423 = vmatpush1.msra.mxu0 0.0
    %1424 = vmatprep.subr.mxu0 0.0
    %1425 = vmatpush1.msra.mxu0 0.0
    %1426 = vmatprep.subr.mxu0 0.0
    %1427 = vmatpush1.msra.mxu0 0.0
    %1428 = vmatprep.subr.mxu0 0.0
    %1429 = vmatpush1.msra.mxu0 0.0
    %1430 = vmatprep.subr.mxu0 0.0
    %1431 = vmatpush1.msra.mxu0 0.0
    %1432 = vmatprep.subr.mxu0 0.0
    %1433 = vmatpush1.msra.mxu0 0.0
    %1434 = vmatprep.subr.mxu0 0.0
    %1435 = vmatpush1.msra.mxu0 0.0
    %1436 = vmatprep.subr.mxu0 0.0
    %1437 = vmatpush1.msra.mxu0 0.0
    %1438 = vmatprep.subr.mxu0 0.0
    %1439 = vmatpush1.msra.mxu0 0.0
    %1440 = vmatprep.subr.mxu0 0.0
    %1441 = vmatpush1.msra.mxu0 0.0
    %1442 = vmatprep.subr.mxu0 0.0
    %1443 = vmatpush1.msra.mxu0 0.0
    %1444 = vmatprep.subr.mxu0 0.0
    %1445 = vmatpush1.msra.mxu0 %v1366
    %1446 = vmatprep.subr.mxu0 0.0
    %1447 = vmatpush1.msra.mxu0 %v1365
    %1448 = vmatprep.subr.mxu0 0.0
    %1449 = vmatpush1.msra.mxu0 %v1364
    %1450 = vmatprep.subr.mxu0 0.0
    %1451 = vmatpush1.msra.mxu0 %v1363
    %1452 = vmatprep.subr.mxu0 0.0
    %1453 = vmatpush2.msra.mxu0 0.0
    %1454 = vmatprep.subr.mxu0 0.0
    %1455 = vmatpush2.msra.mxu0 0.0
    %1456 = vmatprep.subr.mxu0 0.0
    %1457 = vmatpush2.msra.mxu0 0.0
    %1458 = vmatprep.subr.mxu0 0.0
    %1459 = vmatpush2.msra.mxu0 0.0
    %1460 = vmatprep.subr.mxu0 0.0
    %1461 = vmatpush2.msra.mxu0 0.0
    %1462 = vmatprep.subr.mxu0 0.0
    %1463 = vmatpush2.msra.mxu0 0.0
    %1464 = vmatprep.subr.mxu0 0.0
    %1465 = vmatpush2.msra.mxu0 0.0
    %1466 = vmatprep.subr.mxu0 0.0
    %1467 = vmatpush2.msra.mxu0 0.0
    %1468 = vmatprep.subr.mxu0 0.0
    %1469 = vmatpush2.msra.mxu0 0.0
    %1470 = vmatprep.subr.mxu0 0.0
    %1471 = vmatpush2.msra.mxu0 0.0
    %1472 = vmatprep.subr.mxu0 0.0
    %1473 = vmatpush2.msra.mxu0 0.0
    %1474 = vmatprep.subr.mxu0 0.0
    %1475 = vmatpush2.msra.mxu0 0.0
    %1476 = vmatprep.subr.mxu0 0.0
    %1477 = vmatpush2.msra.mxu0 0.0
    %1478 = vmatprep.subr.mxu0 0.0
    %1479 = vmatpush2.msra.mxu0 0.0
    %1480 = vmatprep.subr.mxu0 0.0
    %1481 = vmatpush2.msra.mxu0 0.0
    %1482 = vmatprep.subr.mxu0 0.0
    %1483 = vmatpush2.msra.mxu0 0.0
    %1484 = vmatprep.mubr.f32.mxu0 0.0
    %1485 = vmatmul.mubr.f32.gmra.mxu0 %v1373
    %v1486 = vpop.f32.mrf.mxu0
    %v1487 = vadd.f32 %v1371, %v1486
    %v1488 = vpop.f32.mrf.mxu0
    %1489 = vmatprep.mubr.f32.mxu0 0.0
    %1490 = vmatmul.mubr.f32.gmra.mxu0 %v1376
    %v1491 = vpop.f32.mrf.mxu0
    %v1492 = vadd.f32 %v1371, %v1491
    %v1493 = vpop.f32.mrf.mxu0
    %1494 = vmatprep.mubr.f32.mxu0 0.0
    %1495 = vmatmul.mubr.f32.gmra.mxu0 %v1379
    %v1496 = vpop.f32.mrf.mxu0
    %v1497 = vadd.f32 %v1371, %v1496
    %v1498 = vpop.f32.mrf.mxu0
    %1499 = vmatprep.mubr.f32.mxu0 0.0
    %1500 = vmatmul.mubr.f32.gmra.mxu0 %v1382
    %v1501 = vpop.f32.mrf.mxu0
    %v1502 = vadd.f32 %v1371, %v1501
    %v1503 = vpop.f32.mrf.mxu0
    %1504 = vmatprep.mubr.f32.mxu0 0.0
    %1505 = vmatmul.mubr.f32.gmra.mxu0 %v1385
    %v1506 = vpop.f32.mrf.mxu0
    %v1507 = vadd.f32 %v1371, %v1506
    %v1508 = vpop.f32.mrf.mxu0
    %1509 = vmatprep.mubr.f32.mxu0 0.0
    %1510 = vmatmul.mubr.f32.gmra.mxu0 %v1388
    %v1511 = vpop.f32.mrf.mxu0
    %v1512 = vadd.f32 %v1371, %v1511
    %v1513 = vpop.f32.mrf.mxu0
    %1514 = vmatprep.mubr.f32.mxu0 0.0
    %1515 = vmatmul.mubr.f32.gmra.mxu0 %v1391
    %v1516 = vpop.f32.mrf.mxu0
    %v1517 = vadd.f32 %v1371, %v1516
    %v1518 = vpop.f32.mrf.mxu0
    %1519 = vmatprep.mubr.f32.mxu0 0.0
    %1520 = vmatmul.mubr.f32.gmra.mxu0 %v1394
    %v1521 = vpop.f32.mrf.mxu0
    %v1522 = vadd.f32 %v1371, %v1521
    %v1523 = vpop.f32.mrf.mxu0
    %1524 = vmatprep.mubr.f32.mxu0 0.0
    %1525 = vmatmul.mubr.f32.gmra.mxu0 %v1397
    %v1526 = vpop.f32.mrf.mxu0
    %v1527 = vadd.f32 %v1371, %v1526
    %v1528 = vpop.f32.mrf.mxu0
    %1529 = vmatprep.mubr.f32.mxu0 0.0
    %1530 = vmatmul.mubr.f32.gmra.mxu0 %v1400
    %v1531 = vpop.f32.mrf.mxu0
    %v1532 = vadd.f32 %v1371, %v1531
    %v1533 = vpop.f32.mrf.mxu0
    %1534 = vmatprep.mubr.f32.mxu0 0.0
    %1535 = vmatmul.mubr.f32.gmra.mxu0 %v1403
    %v1536 = vpop.f32.mrf.mxu0
    %v1537 = vadd.f32 %v1371, %v1536
    %v1538 = vpop.f32.mrf.mxu0
    %1539 = vmatprep.mubr.f32.mxu0 0.0
    %1540 = vmatmul.mubr.f32.gmra.mxu0 %v1406
    %v1541 = vpop.f32.mrf.mxu0
    %v1542 = vadd.f32 %v1371, %v1541
    %v1543 = vpop.f32.mrf.mxu0
    %1544 = vmatprep.mubr.f32.mxu0 0.0
    %1545 = vmatmul.mubr.f32.gmra.mxu0 %v1409
    %v1546 = vpop.f32.mrf.mxu0
    %v1547 = vadd.f32 %v1371, %v1546
    %v1548 = vpop.f32.mrf.mxu0
    %1549 = vmatprep.mubr.f32.mxu0 0.0
    %1550 = vmatmul.mubr.f32.gmra.mxu0 %v1412
    %v1551 = vpop.f32.mrf.mxu0
    %v1552 = vadd.f32 %v1371, %v1551
    %v1553 = vpop.f32.mrf.mxu0
    %1554 = vmatprep.mubr.f32.mxu0 0.0
    %1555 = vmatmul.mubr.f32.gmra.mxu0 %v1415
    %v1556 = vpop.f32.mrf.mxu0
    %v1557 = vadd.f32 %v1371, %v1556
    %v1558 = vpop.f32.mrf.mxu0
    %1559 = vmatprep.mubr.f32.mxu0 0.0
    %1560 = vmatmul.mubr.f32.gmra.mxu0 %v1418
    %v1561 = vpop.f32.mrf.mxu0
    %v1562 = vadd.f32 %v1371, %v1561
    %v1563 = vpop.f32.mrf.mxu0
    %1564 = vdwg.mxu0
    %v1565 = vadd.f32 %v911, %v1487
    %v1566 = vadd.f32 %v912, %v1492
    %v1567 = vadd.f32 %v913, %v1497
    %v1568 = vadd.f32 %v914, %v1502
    %v1569 = vadd.f32 %v915, %v1507
    %v1570 = vadd.f32 %v916, %v1512
    %v1571 = vadd.f32 %v917, %v1517
    %v1572 = vadd.f32 %v918, %v1522
    %v1573 = vadd.f32 %v919, %v1527
    %v1574 = vadd.f32 %v920, %v1532
    %v1575 = vadd.f32 %v921, %v1537
    %v1576 = vadd.f32 %v922, %v1542
    %v1577 = vadd.f32 %v923, %v1547
    %v1578 = vadd.f32 %v924, %v1552
    %v1579 = vadd.f32 %v925, %v1557
    %v1580 = vadd.f32 %v926, %v1562
    %1581 = vst.msk [vmem:[#allocation2 + $0x8] sm:$0xff] %vm252, %v1565
    %1582 = vst.msk [vmem:[#allocation2 + $0x10] sm:$0xff] %vm252, %v1566
    %1583 = vst.msk [vmem:[#allocation2 + $0x18] sm:$0xff] %vm252, %v1567
    %1584 = vst.msk [vmem:[#allocation2 + $0x20] sm:$0xff] %vm252, %v1568
    %1585 = vst.msk [vmem:[#allocation2 + $0x28] sm:$0xff] %vm252, %v1569
    %1586 = vst.msk [vmem:[#allocation2 + $0x30] sm:$0xff] %vm252, %v1570
    %1587 = vst.msk [vmem:[#allocation2 + $0x38] sm:$0xff] %vm252, %v1571
    %1588 = vst.msk [vmem:[#allocation2 + $0x40] sm:$0xff] %vm252, %v1572
    %1589 = vst.msk [vmem:[#allocation2 + $0x58] sm:$0xff] %vm252, %v1573
    %1590 = vst.msk [vmem:[#allocation2 + $0x60] sm:$0xff] %vm252, %v1574
    %1591 = vst.msk [vmem:[#allocation2 + $0x68] sm:$0xff] %vm252, %v1575
    %1592 = vst.msk [vmem:[#allocation2 + $0x70] sm:$0xff] %vm252, %v1576
    %1593 = vst.msk [vmem:[#allocation2 + $0x78] sm:$0xff] %vm252, %v1577
    %1594 = vst.msk [vmem:[#allocation2 + $0x80] sm:$0xff] %vm252, %v1578
    %1595 = vst.msk [vmem:[#allocation2 + $0x88] sm:$0xff] %vm252, %v1579
    %1596 = vst.msk [vmem:[#allocation2 + $0x90] sm:$0xff] %vm252, %v1580
    %v1597 = vld [vmem:[#allocation2 + $0x4] sm:$0xff]
    %v1598 = vld [vmem:[#allocation2 + $0xc] sm:$0xff]
    %v1599 = vld [vmem:[#allocation2 + $0x14] sm:$0xff]
    %v1600 = vld [vmem:[#allocation2 + $0x1c] sm:$0xff]
    %v1601 = vld [vmem:[#allocation2 + $0x24] sm:$0xff]
    %v1602 = vld [vmem:[#allocation2 + $0x2c] sm:$0xff]
    %v1603 = vld [vmem:[#allocation2 + $0x34] sm:$0xff]
    %v1604 = vld [vmem:[#allocation2 + $0x3c] sm:$0xff]
    %v1605 = vld [vmem:[#allocation2 + $0x54] sm:$0xff]
    %v1606 = vld [vmem:[#allocation2 + $0x5c] sm:$0xff]
    %v1607 = vld [vmem:[#allocation2 + $0x64] sm:$0xff]
    %v1608 = vld [vmem:[#allocation2 + $0x6c] sm:$0xff]
    %v1609 = vld [vmem:[#allocation2 + $0x74] sm:$0xff]
    %v1610 = vld [vmem:[#allocation2 + $0x7c] sm:$0xff]
    %v1611 = vld [vmem:[#allocation2 + $0x84] sm:$0xff]
    %v1612 = vld [vmem:[#allocation2 + $0x8c] sm:$0xff]
    %v1613 = vld [vmem:[#allocation2 + $0x44] sm:$0xff]
    %v1614 = vld [vmem:[#allocation2 + $0x94] sm:$0xff]
    %1631 = vrot.lane.b32.xlu0 %v1565, 32
    %v1632 = vpop.permute.xlu0 %1631
    %1633 = vrot.lane.b32.xlu0 %v1566, 32
    %v1634 = vpop.permute.xlu0 %1633
    %1635 = vrot.lane.b32.xlu0 %v1567, 32
    %v1636 = vpop.permute.xlu0 %1635
    %1637 = vrot.lane.b32.xlu0 %v1568, 32
    %v1638 = vpop.permute.xlu0 %1637
    %1639 = vrot.lane.b32.xlu0 %v1569, 32
    %v1640 = vpop.permute.xlu0 %1639
    %1641 = vrot.lane.b32.xlu0 %v1570, 32
    %v1642 = vpop.permute.xlu0 %1641
    %1643 = vrot.lane.b32.xlu0 %v1571, 32
    %v1644 = vpop.permute.xlu0 %1643
    %1645 = vrot.lane.b32.xlu0 %v1572, 32
    %v1646 = vpop.permute.xlu0 %1645
    %1647 = vrot.lane.b32.xlu0 %v1573, 32
    %v1648 = vpop.permute.xlu0 %1647
    %1649 = vrot.lane.b32.xlu0 %v1574, 32
    %v1650 = vpop.permute.xlu0 %1649
    %1651 = vrot.lane.b32.xlu0 %v1575, 32
    %v1652 = vpop.permute.xlu0 %1651
    %1653 = vrot.lane.b32.xlu0 %v1576, 32
    %v1654 = vpop.permute.xlu0 %1653
    %1655 = vrot.lane.b32.xlu0 %v1577, 32
    %v1656 = vpop.permute.xlu0 %1655
    %1657 = vrot.lane.b32.xlu0 %v1578, 32
    %v1658 = vpop.permute.xlu0 %1657
    %1659 = vrot.lane.b32.xlu0 %v1579, 32
    %v1660 = vpop.permute.xlu0 %1659
    %1661 = vrot.lane.b32.xlu0 %v1580, 32
    %v1662 = vpop.permute.xlu0 %1661
    %1695 = vrot.lane.b32.xlu0 %v1598, 64
    %v1696 = vpop.permute.xlu0 %1695
    %1697 = vrot.lane.b32.xlu0 %v1599, 64
    %v1698 = vpop.permute.xlu0 %1697
    %1699 = vrot.lane.b32.xlu0 %v1600, 64
    %v1700 = vpop.permute.xlu0 %1699
    %1701 = vrot.lane.b32.xlu0 %v1601, 64
    %v1702 = vpop.permute.xlu0 %1701
    %1703 = vrot.lane.b32.xlu0 %v1602, 64
    %v1704 = vpop.permute.xlu0 %1703
    %1705 = vrot.lane.b32.xlu0 %v1603, 64
    %v1706 = vpop.permute.xlu0 %1705
    %1707 = vrot.lane.b32.xlu0 %v1604, 64
    %v1708 = vpop.permute.xlu0 %1707
    %1709 = vrot.lane.b32.xlu0 %v1613, 64
    %v1710 = vpop.permute.xlu0 %1709
    %1711 = vrot.lane.b32.xlu0 %v1606, 64
    %v1712 = vpop.permute.xlu0 %1711
    %1713 = vrot.lane.b32.xlu0 %v1607, 64
    %v1714 = vpop.permute.xlu0 %1713
    %1715 = vrot.lane.b32.xlu0 %v1608, 64
    %v1716 = vpop.permute.xlu0 %1715
    %1717 = vrot.lane.b32.xlu0 %v1609, 64
    %v1718 = vpop.permute.xlu0 %1717
    %1719 = vrot.lane.b32.xlu0 %v1610, 64
    %v1720 = vpop.permute.xlu0 %1719
    %1721 = vrot.lane.b32.xlu0 %v1611, 64
    %v1722 = vpop.permute.xlu0 %1721
    %1723 = vrot.lane.b32.xlu0 %v1612, 64
    %v1724 = vpop.permute.xlu0 %1723
    %1725 = vrot.lane.b32.xlu0 %v1614, 64
    %v1726 = vpop.permute.xlu0 %1725
    %v1743 = vsel %vm252, %v1597, %v1632
    %v1744 = vsel %vm252, %v1598, %v1634
    %v1745 = vsel %vm252, %v1599, %v1636
    %v1746 = vsel %vm252, %v1600, %v1638
    %v1747 = vsel %vm252, %v1601, %v1640
    %v1748 = vsel %vm252, %v1602, %v1642
    %v1749 = vsel %vm252, %v1603, %v1644
    %v1750 = vsel %vm252, %v1604, %v1646
    %v1751 = vsel %vm252, %v1605, %v1648
    %v1752 = vsel %vm252, %v1606, %v1650
    %v1753 = vsel %vm252, %v1607, %v1652
    %v1754 = vsel %vm252, %v1608, %v1654
    %v1755 = vsel %vm252, %v1609, %v1656
    %v1756 = vsel %vm252, %v1610, %v1658
    %v1757 = vsel %vm252, %v1611, %v1660
    %v1758 = vsel %vm252, %v1612, %v1662
    %v1759 = vsel %vm465, %v1743, %v1696
    %v1760 = vsel %vm465, %v1744, %v1698
    %v1761 = vsel %vm465, %v1745, %v1700
    %v1762 = vsel %vm465, %v1746, %v1702
    %v1763 = vsel %vm465, %v1747, %v1704
    %v1764 = vsel %vm465, %v1748, %v1706
    %v1765 = vsel %vm465, %v1749, %v1708
    %v1766 = vsel %vm465, %v1750, %v1710
    %v1767 = vsel %vm465, %v1751, %v1712
    %v1768 = vsel %vm465, %v1752, %v1714
    %v1769 = vsel %vm465, %v1753, %v1716
    %v1770 = vsel %vm465, %v1754, %v1718
    %v1771 = vsel %vm465, %v1755, %v1720
    %v1772 = vsel %vm465, %v1756, %v1722
    %v1773 = vsel %vm465, %v1757, %v1724
    %v1774 = vsel %vm465, %v1758, %v1726
    %s1775 = scalar_lea.vmem %s3, 192
    %v1776 = vld [vmem:[%s1775] sm:$0xff]
    %v1777 = vld [vmem:[%s1775 + $0x8] sm:$0xff]
    %v1778 = vld [vmem:[%s1775 + $0x10] sm:$0xff]
    %v1779 = vld [vmem:[%s1775 + $0x18] sm:$0xff]
    %v1780 = vld [vmem:[%s1775 + $0x20] sm:$0xff]
    %v1781 = vld [vmem:[%s1775 + $0x28] sm:$0xff]
    %v1782 = vld [vmem:[%s1775 + $0x30] sm:$0xff]
    %v1783 = vld [vmem:[%s1775 + $0x38] sm:$0xff]
    %v1784 = vld [vmem:[%s1775 + $0x40] sm:$0xff]
    %v1785 = vld [vmem:[%s1775 + $0x48] sm:$0xff]
    %v1786 = vld [vmem:[%s1775 + $0x50] sm:$0xff]
    %v1787 = vld [vmem:[%s1775 + $0x58] sm:$0xff]
    %v1788 = vld [vmem:[%s4 + $0x2] sm:$0x1]
    %v1789 = vlaneseq
    %v1790 = vshrl.u32 %v1789, 7
    %v1791 = vsub.s32 0, %v1790
    %v1792 = vrot.slane %v1788, %v1791
    %v1794 = vsel %vm499, %v1759, 0
    %v1797 = vsel %vm499, %v1760, 0
    %v1800 = vsel %vm499, %v1761, 0
    %v1803 = vsel %vm499, %v1762, 0
    %v1806 = vsel %vm499, %v1763, 0
    %v1809 = vsel %vm499, %v1764, 0
    %v1812 = vsel %vm499, %v1765, 0
    %v1815 = vsel %vm499, %v1766, 0
    %v1818 = vsel %vm499, %v1767, 0
    %v1821 = vsel %vm499, %v1768, 0
    %v1824 = vsel %vm499, %v1769, 0
    %v1827 = vsel %vm499, %v1770, 0
    %v1830 = vsel %vm499, %v1771, 0
    %v1833 = vsel %vm499, %v1772, 0
    %v1836 = vsel %vm499, %v1773, 0
    %v1839 = vsel %vm499, %v1774, 0
    %1841 = vmatprep.subr.mxu0 0.0
    %1842 = vmatpush1.msra.mxu0 0.0
    %1843 = vmatprep.subr.mxu0 0.0
    %1844 = vmatpush1.msra.mxu0 0.0
    %1845 = vmatprep.subr.mxu0 0.0
    %1846 = vmatpush1.msra.mxu0 0.0
    %1847 = vmatprep.subr.mxu0 0.0
    %1848 = vmatpush1.msra.mxu0 0.0
    %1849 = vmatprep.subr.mxu0 0.0
    %1850 = vmatpush1.msra.mxu0 %v1787
    %1851 = vmatprep.subr.mxu0 0.0
    %1852 = vmatpush1.msra.mxu0 %v1786
    %1853 = vmatprep.subr.mxu0 0.0
    %1854 = vmatpush1.msra.mxu0 %v1785
    %1855 = vmatprep.subr.mxu0 0.0
    %1856 = vmatpush1.msra.mxu0 %v1784
    %1857 = vmatprep.subr.mxu0 0.0
    %1858 = vmatpush1.msra.mxu0 %v1783
    %1859 = vmatprep.subr.mxu0 0.0
    %1860 = vmatpush1.msra.mxu0 %v1782
    %1861 = vmatprep.subr.mxu0 0.0
    %1862 = vmatpush1.msra.mxu0 %v1781
    %1863 = vmatprep.subr.mxu0 0.0
    %1864 = vmatpush1.msra.mxu0 %v1780
    %1865 = vmatprep.subr.mxu0 0.0
    %1866 = vmatpush1.msra.mxu0 %v1779
    %1867 = vmatprep.subr.mxu0 0.0
    %1868 = vmatpush1.msra.mxu0 %v1778
    %1869 = vmatprep.subr.mxu0 0.0
    %1870 = vmatpush1.msra.mxu0 %v1777
    %1871 = vmatprep.subr.mxu0 0.0
    %1872 = vmatpush1.msra.mxu0 %v1776
    %1873 = vmatprep.subr.mxu0 0.0
    %1874 = vmatpush2.msra.mxu0 0.0
    %1875 = vmatprep.subr.mxu0 0.0
    %1876 = vmatpush2.msra.mxu0 0.0
    %1877 = vmatprep.subr.mxu0 0.0
    %1878 = vmatpush2.msra.mxu0 0.0
    %1879 = vmatprep.subr.mxu0 0.0
    %1880 = vmatpush2.msra.mxu0 0.0
    %1881 = vmatprep.subr.mxu0 0.0
    %1882 = vmatpush2.msra.mxu0 0.0
    %1883 = vmatprep.subr.mxu0 0.0
    %1884 = vmatpush2.msra.mxu0 0.0
    %1885 = vmatprep.subr.mxu0 0.0
    %1886 = vmatpush2.msra.mxu0 0.0
    %1887 = vmatprep.subr.mxu0 0.0
    %1888 = vmatpush2.msra.mxu0 0.0
    %1889 = vmatprep.subr.mxu0 0.0
    %1890 = vmatpush2.msra.mxu0 0.0
    %1891 = vmatprep.subr.mxu0 0.0
    %1892 = vmatpush2.msra.mxu0 0.0
    %1893 = vmatprep.subr.mxu0 0.0
    %1894 = vmatpush2.msra.mxu0 0.0
    %1895 = vmatprep.subr.mxu0 0.0
    %1896 = vmatpush2.msra.mxu0 0.0
    %1897 = vmatprep.subr.mxu0 0.0
    %1898 = vmatpush2.msra.mxu0 0.0
    %1899 = vmatprep.subr.mxu0 0.0
    %1900 = vmatpush2.msra.mxu0 0.0
    %1901 = vmatprep.subr.mxu0 0.0
    %1902 = vmatpush2.msra.mxu0 0.0
    %1903 = vmatprep.subr.mxu0 0.0
    %1904 = vmatpush2.msra.mxu0 0.0
    %1905 = vmatprep.mubr.f32.mxu0 0.0
    %1906 = vmatmul.mubr.f32.gmra.mxu0 %v1794
    %v1907 = vpop.f32.mrf.mxu0
    %v1908 = vadd.f32 %v1792, %v1907
    %v1909 = vpop.f32.mrf.mxu0
    %1910 = vmatprep.mubr.f32.mxu0 0.0
    %1911 = vmatmul.mubr.f32.gmra.mxu0 %v1797
    %v1912 = vpop.f32.mrf.mxu0
    %v1913 = vadd.f32 %v1792, %v1912
    %v1914 = vpop.f32.mrf.mxu0
    %1915 = vmatprep.mubr.f32.mxu0 0.0
    %1916 = vmatmul.mubr.f32.gmra.mxu0 %v1800
    %v1917 = vpop.f32.mrf.mxu0
    %v1918 = vadd.f32 %v1792, %v1917
    %v1919 = vpop.f32.mrf.mxu0
    %1920 = vmatprep.mubr.f32.mxu0 0.0
    %1921 = vmatmul.mubr.f32.gmra.mxu0 %v1803
    %v1922 = vpop.f32.mrf.mxu0
    %v1923 = vadd.f32 %v1792, %v1922
    %v1924 = vpop.f32.mrf.mxu0
    %1925 = vmatprep.mubr.f32.mxu0 0.0
    %1926 = vmatmul.mubr.f32.gmra.mxu0 %v1806
    %v1927 = vpop.f32.mrf.mxu0
    %v1928 = vadd.f32 %v1792, %v1927
    %v1929 = vpop.f32.mrf.mxu0
    %1930 = vmatprep.mubr.f32.mxu0 0.0
    %1931 = vmatmul.mubr.f32.gmra.mxu0 %v1809
    %v1932 = vpop.f32.mrf.mxu0
    %v1933 = vadd.f32 %v1792, %v1932
    %v1934 = vpop.f32.mrf.mxu0
    %1935 = vmatprep.mubr.f32.mxu0 0.0
    %1936 = vmatmul.mubr.f32.gmra.mxu0 %v1812
    %v1937 = vpop.f32.mrf.mxu0
    %v1938 = vadd.f32 %v1792, %v1937
    %v1939 = vpop.f32.mrf.mxu0
    %1940 = vmatprep.mubr.f32.mxu0 0.0
    %1941 = vmatmul.mubr.f32.gmra.mxu0 %v1815
    %v1942 = vpop.f32.mrf.mxu0
    %v1943 = vadd.f32 %v1792, %v1942
    %v1944 = vpop.f32.mrf.mxu0
    %1945 = vmatprep.mubr.f32.mxu0 0.0
    %1946 = vmatmul.mubr.f32.gmra.mxu0 %v1818
    %v1947 = vpop.f32.mrf.mxu0
    %v1948 = vadd.f32 %v1792, %v1947
    %v1949 = vpop.f32.mrf.mxu0
    %1950 = vmatprep.mubr.f32.mxu0 0.0
    %1951 = vmatmul.mubr.f32.gmra.mxu0 %v1821
    %v1952 = vpop.f32.mrf.mxu0
    %v1953 = vadd.f32 %v1792, %v1952
    %v1954 = vpop.f32.mrf.mxu0
    %1955 = vmatprep.mubr.f32.mxu0 0.0
    %1956 = vmatmul.mubr.f32.gmra.mxu0 %v1824
    %v1957 = vpop.f32.mrf.mxu0
    %v1958 = vadd.f32 %v1792, %v1957
    %v1959 = vpop.f32.mrf.mxu0
    %1960 = vmatprep.mubr.f32.mxu0 0.0
    %1961 = vmatmul.mubr.f32.gmra.mxu0 %v1827
    %v1962 = vpop.f32.mrf.mxu0
    %v1963 = vadd.f32 %v1792, %v1962
    %v1964 = vpop.f32.mrf.mxu0
    %1965 = vmatprep.mubr.f32.mxu0 0.0
    %1966 = vmatmul.mubr.f32.gmra.mxu0 %v1830
    %v1967 = vpop.f32.mrf.mxu0
    %v1968 = vadd.f32 %v1792, %v1967
    %v1969 = vpop.f32.mrf.mxu0
    %1970 = vmatprep.mubr.f32.mxu0 0.0
    %1971 = vmatmul.mubr.f32.gmra.mxu0 %v1833
    %v1972 = vpop.f32.mrf.mxu0
    %v1973 = vadd.f32 %v1792, %v1972
    %v1974 = vpop.f32.mrf.mxu0
    %1975 = vmatprep.mubr.f32.mxu0 0.0
    %1976 = vmatmul.mubr.f32.gmra.mxu0 %v1836
    %v1977 = vpop.f32.mrf.mxu0
    %v1978 = vadd.f32 %v1792, %v1977
    %v1979 = vpop.f32.mrf.mxu0
    %1980 = vmatprep.mubr.f32.mxu0 0.0
    %1981 = vmatmul.mubr.f32.gmra.mxu0 %v1839
    %v1982 = vpop.f32.mrf.mxu0
    %v1983 = vadd.f32 %v1792, %v1982
    %v1984 = vpop.f32.mrf.mxu0
    %1985 = vdwg.mxu0
    %v1986 = vmax.f32 %v1908, 0.0
    %v1987 = vmax.f32 %v1913, 0.0
    %v1988 = vmax.f32 %v1918, 0.0
    %v1989 = vmax.f32 %v1923, 0.0
    %v1990 = vmax.f32 %v1928, 0.0
    %v1991 = vmax.f32 %v1933, 0.0
    %v1992 = vmax.f32 %v1938, 0.0
    %v1993 = vmax.f32 %v1943, 0.0
    %v1994 = vmax.f32 %v1948, 0.0
    %v1995 = vmax.f32 %v1953, 0.0
    %v1996 = vmax.f32 %v1958, 0.0
    %v1997 = vmax.f32 %v1963, 0.0
    %v1998 = vmax.f32 %v1968, 0.0
    %v1999 = vmax.f32 %v1973, 0.0
    %v2000 = vmax.f32 %v1978, 0.0
    %v2001 = vmax.f32 %v1983, 0.0
    %s2002 = scalar_lea.vmem %s5, 64
    %v2003 = vld [vmem:[%s2002] sm:$0xff]
    %v2004 = vld [vmem:[%s2002 + $0x8] sm:$0xff]
    %v2005 = vld [vmem:[%s2002 + $0x10] sm:$0xff]
    %v2006 = vld [vmem:[%s2002 + $0x18] sm:$0xff]
    %v2007 = vld [vmem:[%s6 + $0x2] sm:$0x1]
    %v2008 = vlaneseq
    %v2009 = vshrl.u32 %v2008, 7
    %v2010 = vsub.s32 0, %v2009
    %v2011 = vrot.slane %v2007, %v2010
    %v2013 = vsel %vm252, %v1986, 0
    %v2016 = vsel %vm252, %v1987, 0
    %v2019 = vsel %vm252, %v1988, 0
    %v2022 = vsel %vm252, %v1989, 0
    %v2025 = vsel %vm252, %v1990, 0
    %v2028 = vsel %vm252, %v1991, 0
    %v2031 = vsel %vm252, %v1992, 0
    %v2034 = vsel %vm252, %v1993, 0
    %v2037 = vsel %vm252, %v1994, 0
    %v2040 = vsel %vm252, %v1995, 0
    %v2043 = vsel %vm252, %v1996, 0
    %v2046 = vsel %vm252, %v1997, 0
    %v2049 = vsel %vm252, %v1998, 0
    %v2052 = vsel %vm252, %v1999, 0
    %v2055 = vsel %vm252, %v2000, 0
    %v2058 = vsel %vm252, %v2001, 0
    %2060 = vmatprep.subr.mxu0 0.0
    %2061 = vmatpush1.msra.mxu0 0.0
    %2062 = vmatprep.subr.mxu0 0.0
    %2063 = vmatpush1.msra.mxu0 0.0
    %2064 = vmatprep.subr.mxu0 0.0
    %2065 = vmatpush1.msra.mxu0 0.0
    %2066 = vmatprep.subr.mxu0 0.0
    %2067 = vmatpush1.msra.mxu0 0.0
    %2068 = vmatprep.subr.mxu0 0.0
    %2069 = vmatpush1.msra.mxu0 0.0
    %2070 = vmatprep.subr.mxu0 0.0
    %2071 = vmatpush1.msra.mxu0 0.0
    %2072 = vmatprep.subr.mxu0 0.0
    %2073 = vmatpush1.msra.mxu0 0.0
    %2074 = vmatprep.subr.mxu0 0.0
    %2075 = vmatpush1.msra.mxu0 0.0
    %2076 = vmatprep.subr.mxu0 0.0
    %2077 = vmatpush1.msra.mxu0 0.0
    %2078 = vmatprep.subr.mxu0 0.0
    %2079 = vmatpush1.msra.mxu0 0.0
    %2080 = vmatprep.subr.mxu0 0.0
    %2081 = vmatpush1.msra.mxu0 0.0
    %2082 = vmatprep.subr.mxu0 0.0
    %2083 = vmatpush1.msra.mxu0 0.0
    %2084 = vmatprep.subr.mxu0 0.0
    %2085 = vmatpush1.msra.mxu0 %v2006
    %2086 = vmatprep.subr.mxu0 0.0
    %2087 = vmatpush1.msra.mxu0 %v2005
    %2088 = vmatprep.subr.mxu0 0.0
    %2089 = vmatpush1.msra.mxu0 %v2004
    %2090 = vmatprep.subr.mxu0 0.0
    %2091 = vmatpush1.msra.mxu0 %v2003
    %2092 = vmatprep.subr.mxu0 0.0
    %2093 = vmatpush2.msra.mxu0 0.0
    %2094 = vmatprep.subr.mxu0 0.0
    %2095 = vmatpush2.msra.mxu0 0.0
    %2096 = vmatprep.subr.mxu0 0.0
    %2097 = vmatpush2.msra.mxu0 0.0
    %2098 = vmatprep.subr.mxu0 0.0
    %2099 = vmatpush2.msra.mxu0 0.0
    %2100 = vmatprep.subr.mxu0 0.0
    %2101 = vmatpush2.msra.mxu0 0.0
    %2102 = vmatprep.subr.mxu0 0.0
    %2103 = vmatpush2.msra.mxu0 0.0
    %2104 = vmatprep.subr.mxu0 0.0
    %2105 = vmatpush2.msra.mxu0 0.0
    %2106 = vmatprep.subr.mxu0 0.0
    %2107 = vmatpush2.msra.mxu0 0.0
    %2108 = vmatprep.subr.mxu0 0.0
    %2109 = vmatpush2.msra.mxu0 0.0
    %2110 = vmatprep.subr.mxu0 0.0
    %2111 = vmatpush2.msra.mxu0 0.0
    %2112 = vmatprep.subr.mxu0 0.0
    %2113 = vmatpush2.msra.mxu0 0.0
    %2114 = vmatprep.subr.mxu0 0.0
    %2115 = vmatpush2.msra.mxu0 0.0
    %2116 = vmatprep.subr.mxu0 0.0
    %2117 = vmatpush2.msra.mxu0 0.0
    %2118 = vmatprep.subr.mxu0 0.0
    %2119 = vmatpush2.msra.mxu0 0.0
    %2120 = vmatprep.subr.mxu0 0.0
    %2121 = vmatpush2.msra.mxu0 0.0
    %2122 = vmatprep.subr.mxu0 0.0
    %2123 = vmatpush2.msra.mxu0 0.0
    %2124 = vmatprep.mubr.f32.mxu0 0.0
    %2125 = vmatmul.mubr.f32.gmra.mxu0 %v2013
    %v2126 = vpop.f32.mrf.mxu0
    %v2127 = vadd.f32 %v2011, %v2126
    %v2128 = vpop.f32.mrf.mxu0
    %2129 = vmatprep.mubr.f32.mxu0 0.0
    %2130 = vmatmul.mubr.f32.gmra.mxu0 %v2016
    %v2131 = vpop.f32.mrf.mxu0
    %v2132 = vadd.f32 %v2011, %v2131
    %v2133 = vpop.f32.mrf.mxu0
    %2134 = vmatprep.mubr.f32.mxu0 0.0
    %2135 = vmatmul.mubr.f32.gmra.mxu0 %v2019
    %v2136 = vpop.f32.mrf.mxu0
    %v2137 = vadd.f32 %v2011, %v2136
    %v2138 = vpop.f32.mrf.mxu0
    %2139 = vmatprep.mubr.f32.mxu0 0.0
    %2140 = vmatmul.mubr.f32.gmra.mxu0 %v2022
    %v2141 = vpop.f32.mrf.mxu0
    %v2142 = vadd.f32 %v2011, %v2141
    %v2143 = vpop.f32.mrf.mxu0
    %2144 = vmatprep.mubr.f32.mxu0 0.0
    %2145 = vmatmul.mubr.f32.gmra.mxu0 %v2025
    %v2146 = vpop.f32.mrf.mxu0
    %v2147 = vadd.f32 %v2011, %v2146
    %v2148 = vpop.f32.mrf.mxu0
    %2149 = vmatprep.mubr.f32.mxu0 0.0
    %2150 = vmatmul.mubr.f32.gmra.mxu0 %v2028
    %v2151 = vpop.f32.mrf.mxu0
    %v2152 = vadd.f32 %v2011, %v2151
    %v2153 = vpop.f32.mrf.mxu0
    %2154 = vmatprep.mubr.f32.mxu0 0.0
    %2155 = vmatmul.mubr.f32.gmra.mxu0 %v2031
    %v2156 = vpop.f32.mrf.mxu0
    %v2157 = vadd.f32 %v2011, %v2156
    %v2158 = vpop.f32.mrf.mxu0
    %2159 = vmatprep.mubr.f32.mxu0 0.0
    %2160 = vmatmul.mubr.f32.gmra.mxu0 %v2034
    %v2161 = vpop.f32.mrf.mxu0
    %v2162 = vadd.f32 %v2011, %v2161
    %v2163 = vpop.f32.mrf.mxu0
    %2164 = vmatprep.mubr.f32.mxu0 0.0
    %2165 = vmatmul.mubr.f32.gmra.mxu0 %v2037
    %v2166 = vpop.f32.mrf.mxu0
    %v2167 = vadd.f32 %v2011, %v2166
    %v2168 = vpop.f32.mrf.mxu0
    %2169 = vmatprep.mubr.f32.mxu0 0.0
    %2170 = vmatmul.mubr.f32.gmra.mxu0 %v2040
    %v2171 = vpop.f32.mrf.mxu0
    %v2172 = vadd.f32 %v2011, %v2171
    %v2173 = vpop.f32.mrf.mxu0
    %2174 = vmatprep.mubr.f32.mxu0 0.0
    %2175 = vmatmul.mubr.f32.gmra.mxu0 %v2043
    %v2176 = vpop.f32.mrf.mxu0
    %v2177 = vadd.f32 %v2011, %v2176
    %v2178 = vpop.f32.mrf.mxu0
    %2179 = vmatprep.mubr.f32.mxu0 0.0
    %2180 = vmatmul.mubr.f32.gmra.mxu0 %v2046
    %v2181 = vpop.f32.mrf.mxu0
    %v2182 = vadd.f32 %v2011, %v2181
    %v2183 = vpop.f32.mrf.mxu0
    %2184 = vmatprep.mubr.f32.mxu0 0.0
    %2185 = vmatmul.mubr.f32.gmra.mxu0 %v2049
    %v2186 = vpop.f32.mrf.mxu0
    %v2187 = vadd.f32 %v2011, %v2186
    %v2188 = vpop.f32.mrf.mxu0
    %2189 = vmatprep.mubr.f32.mxu0 0.0
    %2190 = vmatmul.mubr.f32.gmra.mxu0 %v2052
    %v2191 = vpop.f32.mrf.mxu0
    %v2192 = vadd.f32 %v2011, %v2191
    %v2193 = vpop.f32.mrf.mxu0
    %2194 = vmatprep.mubr.f32.mxu0 0.0
    %2195 = vmatmul.mubr.f32.gmra.mxu0 %v2055
    %v2196 = vpop.f32.mrf.mxu0
    %v2197 = vadd.f32 %v2011, %v2196
    %v2198 = vpop.f32.mrf.mxu0
    %2199 = vmatprep.mubr.f32.mxu0 0.0
    %2200 = vmatmul.mubr.f32.gmra.mxu0 %v2058
    %v2201 = vpop.f32.mrf.mxu0
    %v2202 = vadd.f32 %v2011, %v2201
    %v2203 = vpop.f32.mrf.mxu0
    %2204 = vdwg.mxu0
    %v2205 = vadd.f32 %v1565, %v2127
    %v2206 = vadd.f32 %v1566, %v2132
    %v2207 = vadd.f32 %v1567, %v2137
    %v2208 = vadd.f32 %v1568, %v2142
    %v2209 = vadd.f32 %v1569, %v2147
    %v2210 = vadd.f32 %v1570, %v2152
    %v2211 = vadd.f32 %v1571, %v2157
    %v2212 = vadd.f32 %v1572, %v2162
    %v2213 = vadd.f32 %v1573, %v2167
    %v2214 = vadd.f32 %v1574, %v2172
    %v2215 = vadd.f32 %v1575, %v2177
    %v2216 = vadd.f32 %v1576, %v2182
    %v2217 = vadd.f32 %v1577, %v2187
    %v2218 = vadd.f32 %v1578, %v2192
    %v2219 = vadd.f32 %v1579, %v2197
    %v2220 = vadd.f32 %v1580, %v2202
    %v2221 = vld [vmem:[%s7] sm:$0xff]
    %v2222 = vld [vmem:[%s7 + $0x8] sm:$0xff]
    %v2223 = vld [vmem:[%s7 + $0x10] sm:$0xff]
    %v2224 = vld [vmem:[%s7 + $0x18] sm:$0xff]
    %v2225 = vld [vmem:[%s8] sm:$0x1]
    %v2227 = vlaneseq
    %v2228 = vshrl.u32 %v2227, 7
    %v2229 = vsub.s32 0, %v2228
    %v2230 = vrot.slane %v2225, %v2229
    %v2233 = vsel %vm252, %v2205, 0
    %v2236 = vsel %vm252, %v2206, 0
    %v2239 = vsel %vm252, %v2207, 0
    %v2242 = vsel %vm252, %v2208, 0
    %v2245 = vsel %vm252, %v2209, 0
    %v2248 = vsel %vm252, %v2210, 0
    %v2251 = vsel %vm252, %v2211, 0
    %v2254 = vsel %vm252, %v2212, 0
    %v2257 = vsel %vm252, %v2213, 0
    %v2260 = vsel %vm252, %v2214, 0
    %v2263 = vsel %vm252, %v2215, 0
    %v2266 = vsel %vm252, %v2216, 0
    %v2269 = vsel %vm252, %v2217, 0
    %v2272 = vsel %vm252, %v2218, 0
    %v2275 = vsel %vm252, %v2219, 0
    %v2278 = vsel %vm252, %v2220, 0
    %2280 = vmatprep.subr.mxu0 0.0
    %2281 = vmatpush1.msra.mxu0 0.0
    %2282 = vmatprep.subr.mxu0 0.0
    %2283 = vmatpush1.msra.mxu0 0.0
    %2284 = vmatprep.subr.mxu0 0.0
    %2285 = vmatpush1.msra.mxu0 0.0
    %2286 = vmatprep.subr.mxu0 0.0
    %2287 = vmatpush1.msra.mxu0 0.0
    %2288 = vmatprep.subr.mxu0 0.0
    %2289 = vmatpush1.msra.mxu0 0.0
    %2290 = vmatprep.subr.mxu0 0.0
    %2291 = vmatpush1.msra.mxu0 0.0
    %2292 = vmatprep.subr.mxu0 0.0
    %2293 = vmatpush1.msra.mxu0 0.0
    %2294 = vmatprep.subr.mxu0 0.0
    %2295 = vmatpush1.msra.mxu0 0.0
    %2296 = vmatprep.subr.mxu0 0.0
    %2297 = vmatpush1.msra.mxu0 0.0
    %2298 = vmatprep.subr.mxu0 0.0
    %2299 = vmatpush1.msra.mxu0 0.0
    %2300 = vmatprep.subr.mxu0 0.0
    %2301 = vmatpush1.msra.mxu0 0.0
    %2302 = vmatprep.subr.mxu0 0.0
    %2303 = vmatpush1.msra.mxu0 0.0
    %2304 = vmatprep.subr.mxu0 0.0
    %2305 = vmatpush1.msra.mxu0 %v2224
    %2306 = vmatprep.subr.mxu0 0.0
    %2307 = vmatpush1.msra.mxu0 %v2223
    %2308 = vmatprep.subr.mxu0 0.0
    %2309 = vmatpush1.msra.mxu0 %v2222
    %2310 = vmatprep.subr.mxu0 0.0
    %2311 = vmatpush1.msra.mxu0 %v2221
    %2312 = vmatprep.subr.mxu0 0.0
    %2313 = vmatpush2.msra.mxu0 0.0
    %2314 = vmatprep.subr.mxu0 0.0
    %2315 = vmatpush2.msra.mxu0 0.0
    %2316 = vmatprep.subr.mxu0 0.0
    %2317 = vmatpush2.msra.mxu0 0.0
    %2318 = vmatprep.subr.mxu0 0.0
    %2319 = vmatpush2.msra.mxu0 0.0
    %2320 = vmatprep.subr.mxu0 0.0
    %2321 = vmatpush2.msra.mxu0 0.0
    %2322 = vmatprep.subr.mxu0 0.0
    %2323 = vmatpush2.msra.mxu0 0.0
    %2324 = vmatprep.subr.mxu0 0.0
    %2325 = vmatpush2.msra.mxu0 0.0
    %2326 = vmatprep.subr.mxu0 0.0
    %2327 = vmatpush2.msra.mxu0 0.0
    %2328 = vmatprep.subr.mxu0 0.0
    %2329 = vmatpush2.msra.mxu0 0.0
    %2330 = vmatprep.subr.mxu0 0.0
    %2331 = vmatpush2.msra.mxu0 0.0
    %2332 = vmatprep.subr.mxu0 0.0
    %2333 = vmatpush2.msra.mxu0 0.0
    %2334 = vmatprep.subr.mxu0 0.0
    %2335 = vmatpush2.msra.mxu0 0.0
    %2336 = vmatprep.subr.mxu0 0.0
    %2337 = vmatpush2.msra.mxu0 0.0
    %2338 = vmatprep.subr.mxu0 0.0
    %2339 = vmatpush2.msra.mxu0 0.0
    %2340 = vmatprep.subr.mxu0 0.0
    %2341 = vmatpush2.msra.mxu0 0.0
    %2342 = vmatprep.subr.mxu0 0.0
    %2343 = vmatpush2.msra.mxu0 0.0
    %2344 = vmatprep.mubr.f32.mxu0 0.0
    %2345 = vmatmul.mubr.f32.gmra.mxu0 %v2233
    %v2346 = vpop.f32.mrf.mxu0
    %v2347 = vadd.f32 %v2230, %v2346
    %v2348 = vpop.f32.mrf.mxu0
    %2349 = vmatprep.mubr.f32.mxu0 0.0
    %2350 = vmatmul.mubr.f32.gmra.mxu0 %v2236
    %v2351 = vpop.f32.mrf.mxu0
    %v2352 = vadd.f32 %v2230, %v2351
    %v2353 = vpop.f32.mrf.mxu0
    %2354 = vmatprep.mubr.f32.mxu0 0.0
    %2355 = vmatmul.mubr.f32.gmra.mxu0 %v2239
    %v2356 = vpop.f32.mrf.mxu0
    %v2357 = vadd.f32 %v2230, %v2356
    %v2358 = vpop.f32.mrf.mxu0
    %2359 = vmatprep.mubr.f32.mxu0 0.0
    %2360 = vmatmul.mubr.f32.gmra.mxu0 %v2242
    %v2361 = vpop.f32.mrf.mxu0
    %v2362 = vadd.f32 %v2230, %v2361
    %v2363 = vpop.f32.mrf.mxu0
    %2364 = vmatprep.mubr.f32.mxu0 0.0
    %2365 = vmatmul.mubr.f32.gmra.mxu0 %v2245
    %v2366 = vpop.f32.mrf.mxu0
    %v2367 = vadd.f32 %v2230, %v2366
    %v2368 = vpop.f32.mrf.mxu0
    %2369 = vmatprep.mubr.f32.mxu0 0.0
    %2370 = vmatmul.mubr.f32.gmra.mxu0 %v2248
    %v2371 = vpop.f32.mrf.mxu0
    %v2372 = vadd.f32 %v2230, %v2371
    %v2373 = vpop.f32.mrf.mxu0
    %2374 = vmatprep.mubr.f32.mxu0 0.0
    %2375 = vmatmul.mubr.f32.gmra.mxu0 %v2251
    %v2376 = vpop.f32.mrf.mxu0
    %v2377 = vadd.f32 %v2230, %v2376
    %v2378 = vpop.f32.mrf.mxu0
    %2379 = vmatprep.mubr.f32.mxu0 0.0
    %2380 = vmatmul.mubr.f32.gmra.mxu0 %v2254
    %v2381 = vpop.f32.mrf.mxu0
    %v2382 = vadd.f32 %v2230, %v2381
    %v2383 = vpop.f32.mrf.mxu0
    %2384 = vmatprep.mubr.f32.mxu0 0.0
    %2385 = vmatmul.mubr.f32.gmra.mxu0 %v2257
    %v2386 = vpop.f32.mrf.mxu0
    %v2387 = vadd.f32 %v2230, %v2386
    %v2388 = vpop.f32.mrf.mxu0
    %2389 = vmatprep.mubr.f32.mxu0 0.0
    %2390 = vmatmul.mubr.f32.gmra.mxu0 %v2260
    %v2391 = vpop.f32.mrf.mxu0
    %v2392 = vadd.f32 %v2230, %v2391
    %v2393 = vpop.f32.mrf.mxu0
    %2394 = vmatprep.mubr.f32.mxu0 0.0
    %2395 = vmatmul.mubr.f32.gmra.mxu0 %v2263
    %v2396 = vpop.f32.mrf.mxu0
    %v2397 = vadd.f32 %v2230, %v2396
    %v2398 = vpop.f32.mrf.mxu0
    %2399 = vmatprep.mubr.f32.mxu0 0.0
    %2400 = vmatmul.mubr.f32.gmra.mxu0 %v2266
    %v2401 = vpop.f32.mrf.mxu0
    %v2402 = vadd.f32 %v2230, %v2401
    %v2403 = vpop.f32.mrf.mxu0
    %2404 = vmatprep.mubr.f32.mxu0 0.0
    %2405 = vmatmul.mubr.f32.gmra.mxu0 %v2269
    %v2406 = vpop.f32.mrf.mxu0
    %v2407 = vadd.f32 %v2230, %v2406
    %v2408 = vpop.f32.mrf.mxu0
    %2409 = vmatprep.mubr.f32.mxu0 0.0
    %2410 = vmatmul.mubr.f32.gmra.mxu0 %v2272
    %v2411 = vpop.f32.mrf.mxu0
    %v2412 = vadd.f32 %v2230, %v2411
    %v2413 = vpop.f32.mrf.mxu0
    %2414 = vmatprep.mubr.f32.mxu0 0.0
    %2415 = vmatmul.mubr.f32.gmra.mxu0 %v2275
    %v2416 = vpop.f32.mrf.mxu0
    %v2417 = vadd.f32 %v2230, %v2416
    %v2418 = vpop.f32.mrf.mxu0
    %2419 = vmatprep.mubr.f32.mxu0 0.0
    %2420 = vmatmul.mubr.f32.gmra.mxu0 %v2278
    %v2421 = vpop.f32.mrf.mxu0
    %v2422 = vadd.f32 %v2230, %v2421
    %v2423 = vpop.f32.mrf.mxu0
    %2424 = vdwg.mxu0
    %2425 = vst [vmem:[#allocation3] sm:$0xff] %v2347
    %2426 = vst [vmem:[#allocation3 + $0x8] sm:$0xff] %v2352
    %2427 = vst [vmem:[#allocation3 + $0x10] sm:$0xff] %v2357
    %2428 = vst [vmem:[#allocation3 + $0x18] sm:$0xff] %v2362
    %2429 = vst [vmem:[#allocation3 + $0x20] sm:$0xff] %v2367
    %2430 = vst [vmem:[#allocation3 + $0x28] sm:$0xff] %v2372
    %2431 = vst [vmem:[#allocation3 + $0x30] sm:$0xff] %v2377
    %2432 = vst [vmem:[#allocation3 + $0x38] sm:$0xff] %v2382
    %2433 = vst [vmem:[#allocation3 + $0x40] sm:$0xff] %v2387
    %2434 = vst [vmem:[#allocation3 + $0x48] sm:$0xff] %v2392
    %2435 = vst [vmem:[#allocation3 + $0x50] sm:$0xff] %v2397
    %2436 = vst [vmem:[#allocation3 + $0x58] sm:$0xff] %v2402
    %2437 = vst [vmem:[#allocation3 + $0x60] sm:$0xff] %v2407
    %2438 = vst [vmem:[#allocation3 + $0x68] sm:$0xff] %v2412
    %2439 = vst [vmem:[#allocation3 + $0x70] sm:$0xff] %v2417
    %2440 = vst [vmem:[#allocation3 + $0x78] sm:$0xff] %v2422
    // Predicated region
    $region38: #{tpu_custom_call.1} parent=1 // pred_check
      _
    $region39: #{tpu_custom_call.1} parent=1 // pred_check_branch
      %2442 = sbr.rel (0) target = $region41
    $region40: #{tpu_custom_call.1} parent=1 // pred_region
      %s2444 = ssub.s32 2048, 2048
      %2445 = vsyncadd [#allocation4], %s2444
      %s2446 = sshll.u32 [#allocation3], 4
      %s2447 = int_to_ptr.vmem [resolvable:$true] %s2446
      %2452 = dma.vmem_to_hbm [thread:$0]  %s2447, 2048, %s9, [#allocation4], 128, 128, 8
    $region41: #{tpu_custom_call.1} parent=1 // pred_fallthru
      _
    // Predicated region
    $region42: #{tpu_custom_call.1} parent=1 // pred_check
      _
    $region43: #{tpu_custom_call.1} parent=1 // pred_check_branch
      %2454 = sbr.rel (0) target = $region45
    $region44: #{tpu_custom_call.1} parent=1 // pred_region
      %2455 = dma.done [#allocation4], 2048
    $region45: #{tpu_custom_call.1} parent=1 // pred_fallthru
      _
    %2456 = vsyncpa [#allocation4], 1

</llo_original>
